<compile_context>
chip_gen: v7x
topology: tpu7x:2x2x1
jax: 0.10.0
libtpu: 0.0.40
codegen_flags: <defaults>
</compile_context>

<pallas_src>
import functools

import jax
import jax.numpy as jnp
from jax.experimental import pallas as pl
from jax.experimental.pallas import tpu as pltpu


# ----------------------------------------------------------------------------
# Fused Pallas kernel: all n_layers dilated "same"-padded Conv1d's for one
# (batch element, L tile) grid step.
# ----------------------------------------------------------------------------
def _wn_in_layers_kernel(xc_ref, xl_ref, xr_ref, w_ref, b_ref, o_ref,
                         xh_ref, xstk_ref, *, dilations, K, Cin, TL,
                         HALO_L, max_pad):
    # xc_ref  : (1, Cin, TL)            f32   centre x tile for this grid step
    # xl_ref  : (1, Cin, TL)            f32   previous L-tile (clamped at edge)
    # xr_ref  : (1, Cin, TL)            f32   next L-tile (clamped at edge)
    # w_ref   : (n_layers, Cout, K*Cin) bf16  pre-packed, resident in VMEM
    # b_ref   : (n_layers, Cout, 1)     f32
    # o_ref   : (n_layers, 1, Cout, TL) bf16  lane-dense output tile
    # xh_ref  : (Cin, HALO_L+TL+max_pad) bf16 haloed x window (zeros = padding)
    # xstk_ref: (2, K*Cin, TL)          bf16  ping-pong K-tap staging buffers
    t = pl.program_id(1)
    last_t = pl.num_programs(1) - 1
    bf = xh_ref.dtype

    # Every column the taps can read -- [HALO_L-max_pad, HALO_L+TL+max_pad) --
    # is (re)written here each grid step, so no conditional scratch init is
    # needed and no state carries between steps: both grid axes are safely
    # "parallel" (megacore-safe on v7x).
    centre = xc_ref[0].astype(bf)
    xh_ref[:, HALO_L:HALO_L + TL] = centre          # 128-aligned store
    if max_pad > 0:
        # Left halo = tail of the previous tile; zeros at the sequence start.
        left = xl_ref[0, :, TL - max_pad:TL].astype(bf)
        xh_ref[:, HALO_L - max_pad:HALO_L] = jnp.where(
            t == 0, jnp.zeros_like(left), left)
        # Right halo = head of the next tile; zeros at the sequence end.
        right = xr_ref[0, :, 0:max_pad].astype(bf)
        xh_ref[:, HALO_L + TL:HALO_L + TL + max_pad] = jnp.where(
            t == last_t, jnp.zeros_like(right), right)

    # Centre tap (k=(K-1)//2) reads the same xh columns for every layer;
    # hoist it out of the layer loop -- once per ping-pong slot.
    kc = (K - 1) // 2
    xstk_ref[0, kc * Cin:(kc + 1) * Cin, :] = centre
    xstk_ref[1, kc * Cin:(kc + 1) * Cin, :] = centre

    # TODO(synk): on v7x the MRB's in-place accumulate would allow K shallow
    # depth-Cin matmuls reading shifted xh views directly (skips xstk store
    # traffic); keep the K-stacked deep contraction on v5e/v6e where it fills
    # the MXU better.
    for l, d in enumerate(dilations):               # static, unrolled
        slot = l & 1                                # ping-pong: overlap tap
        pad = d * (K - 1) // 2                      # copies with the matmul
        for k in range(K):
            if k == kc:
                continue
            start = HALO_L - pad + k * d            # static per (layer, tap)
            xstk_ref[slot, k * Cin:(k + 1) * Cin, :] = \
                xh_ref[:, start:start + TL]
        y = jnp.dot(w_ref[l], xstk_ref[slot],
                    preferred_element_type=jnp.float32)
        o_ref[l, 0] = (y + b_ref[l]).astype(o_ref.dtype)


def wn_in_layers_fused(x, w_packed, b_packed, dilations, *, tile_l=None):
    """All n_layers dilated Conv1d's of WN in one fused, L-tiled Pallas call.

    x        : (B, Cin, L) float32
    w_packed : (n_layers, Cout, K*Cin) bfloat16, column order (tap k, cin)
    b_packed : (n_layers, Cout, 1) float32
    returns  : (n_layers, B, Cout, LP) bfloat16 with LP = ceil(L/TL)*TL.
               Only columns [:L] are valid; the crop is left to the consumer
               so the writeback-bound kernel output is not re-read/re-written
               in HBM just to drop the lane padding.
    """
    B, Cin, L = x.shape
    n_layers, Cout, KC = w_packed.shape
    K = KC // Cin
    max_pad = max(d * (K - 1) // 2 for d in dilations)

    # >=512-lane matmuls amortize MXU weight pushes; fall back to the smallest
    # lane-aligned tile when the whole (padded) length is shorter than that.
    TL = tile_l if tile_l is not None else min(512, pl.cdiv(L, 128) * 128)
    LP = pl.cdiv(L, TL) * TL
    n_t = LP // TL
    HALO_L = pl.cdiv(max_pad, 128) * 128        # keeps the centre store aligned
    W = HALO_L + TL + max_pad

    if LP != L:
        # Pad the *small* input tensor once so blocks tile evenly; padded
        # columns are zeros, matching the conv's "same" zero padding.
        x = jnp.pad(x, ((0, 0), (0, 0), (0, LP - L)))

    # 64 MiB scoped VMEM on 128-MiB parts (v5e/v6e), 32 MiB on v7x (64 MiB).
    try:
        vmem_limit = min(pltpu.get_tpu_info().vmem_capacity_bytes // 2,
                         96 * 1024 * 1024)
    except Exception:
        vmem_limit = 32 * 1024 * 1024

    kernel = functools.partial(
        _wn_in_layers_kernel, dilations=tuple(dilations), K=K, Cin=Cin,
        TL=TL, HALO_L=HALO_L, max_pad=max_pad)

    out = pl.pallas_call(
        kernel,
        out_shape=jax.ShapeDtypeStruct((n_layers, B, Cout, LP), jnp.bfloat16),
        grid=(B, n_t),
        in_specs=[
            pl.BlockSpec((1, Cin, TL), lambda b, t: (b, 0, t)),
            pl.BlockSpec((1, Cin, TL),
                         lambda b, t: (b, 0, jnp.maximum(t - 1, 0))),
            pl.BlockSpec((1, Cin, TL),
                         lambda b, t: (b, 0, jnp.minimum(t + 1, n_t - 1))),
            pl.BlockSpec((n_layers, Cout, KC), lambda b, t: (0, 0, 0)),
            pl.BlockSpec((n_layers, Cout, 1), lambda b, t: (0, 0, 0)),
        ],
        out_specs=pl.BlockSpec((n_layers, 1, Cout, TL),
                               lambda b, t: (0, b, 0, t)),
        scratch_shapes=[
            pltpu.VMEM((Cin, W), jnp.bfloat16),        # haloed x window
            pltpu.VMEM((2, K * Cin, TL), jnp.bfloat16),  # ping-pong tap stack
        ],
        compiler_params=pltpu.CompilerParams(
            dimension_semantics=("parallel", "parallel"),
            vmem_limit_bytes=vmem_limit,
        ),
    )(x, x, x, w_packed, b_packed)
    # TODO(synk): for very large n_layers*Cout on v7x (64 MiB VMEM), add an
    # n_layers grid axis (per-layer weight index_map) so the resident output
    # block shrinks to (1, 1, Cout, TL) and weights stream per layer.
    return out


# ----------------------------------------------------------------------------
# Parameter construction (deterministic, mirrors WN.__init__ shapes)
# ----------------------------------------------------------------------------
def _weight_norm(v):
    # torch weight_norm(name='weight') at init: w = g * v / ||v||, g = ||v||
    # (norm over all dims except dim 0) -> numerically w == v.
    norm = jnp.sqrt(jnp.sum(v * v, axis=(1, 2), keepdims=True))
    return norm * v / norm


def init_wn_params(key, hidden_channels, kernel_size, dilation_rate, n_layers):
    assert kernel_size % 2 == 1, "torch-'same' padding below assumes odd kernel_size"
    assert hidden_channels % 2 == 0
    H, K = hidden_channels, kernel_size
    Cout, Cin = 2 * H, H
    bound = 1.0 / (Cin * K) ** 0.5
    ws, bs, dils = [], [], []
    for i in range(n_layers):
        key, kw, kb = jax.random.split(key, 3)
        v = jax.random.uniform(kw, (Cout, Cin, K), jnp.float32, -bound, bound)
        ws.append(_weight_norm(v))
        bs.append(jax.random.uniform(kb, (Cout,), jnp.float32, -bound, bound))
        dils.append(dilation_rate ** i)
    w_oik = jnp.stack(ws)                      # (n_layers, Cout, Cin, K) f32
    b_all = jnp.stack(bs)                      # (n_layers, Cout)         f32
    # Hoisted weight packing: (Cout, Cin, K) -> (Cout, K*Cin) bf16, done once.
    w_packed = jnp.transpose(w_oik, (0, 1, 3, 2)).reshape(
        n_layers, Cout, K * Cin).astype(jnp.bfloat16)
    b_packed = b_all.reshape(n_layers, Cout, 1)
    # TODO(synk): res_skip_layers / cond_layer exist in __init__ but are never
    # used by the reference forward(), so no parameters are created for them.
    return {"w_oik": w_oik, "b": b_all, "w_packed": w_packed,
            "b_packed": b_packed, "dilations": tuple(dils)}


# ----------------------------------------------------------------------------
# WN forward (faithful to the reference, including its dead-code structure)
# ----------------------------------------------------------------------------
def wn_forward(params, x, x_mask=None, g=None):
    # Reference forward(): per layer computes x_in = drop(in_layers[i](x))
    # (p_dropout = 0 -> identity) and g_l = zeros (g is None), then returns x.
    # x_in_all is the fused conv intermediate in bf16 (f32 accumulation);
    # only its [..., :L] columns are valid (lane padding is left to consumers).
    x_in_all = wn_in_layers_fused(x, params["w_packed"], params["b_packed"],
                                  params["dilations"])
    return x, x_in_all


# ----------------------------------------------------------------------------
# Pure-JAX reference for the conv hot path (correctness check)
# ----------------------------------------------------------------------------
def ref_in_layers(x, w_oik, b, dilations, quantize):
    if quantize:  # mimic the kernel's bf16 MXU operands (f32 accumulation)
        x = x.astype(jnp.bfloat16).astype(jnp.float32)
        w_oik = w_oik.astype(jnp.bfloat16).astype(jnp.float32)
    K = w_oik.shape[-1]
    outs = []
    for l, d in enumerate(dilations):
        pad = d * (K - 1) // 2
        y = jax.lax.conv_general_dilated(
            x, w_oik[l], window_strides=(1,), padding=[(pad, pad)],
            rhs_dilation=(d,), dimension_numbers=("NCH", "OIH", "NCH"),
            precision=jax.lax.Precision.HIGHEST)
        outs.append(y + b[l][None, :, None])
    return jnp.stack(outs)


if __name__ == "__main__":
    # Small shapes consistent with the module (hidden=32 -> conv 32 -> 64 ch).
    B, hidden_channels, L = 2, 32, 16
    kernel_size, dilation_rate, n_layers = 3, 2, 3

    key = jax.random.PRNGKey(0)
    key, kx = jax.random.split(key)
    x = jax.random.normal(kx, (B, hidden_channels, L), jnp.float32)

    params = init_wn_params(key, hidden_channels, kernel_size,
                            dilation_rate, n_layers)

    out, x_in_all = wn_forward(params, x)
    out = jax.block_until_ready(out)
    x_in_all = jax.block_until_ready(x_in_all)

    # Module semantics: forward() returns x unchanged.
    assert out.shape == x.shape and bool(jnp.allclose(out, x)), \
        "WN forward must return x unchanged"
    Cout = 2 * hidden_channels
    assert x_in_all.dtype == jnp.bfloat16
    assert x_in_all.shape[:3] == (n_layers, B, Cout)
    assert x_in_all.shape[3] >= L and x_in_all.shape[3] % 128 == 0

    # Consumer-side crop of the lane padding (folded out of the kernel).
    x_in_valid = x_in_all[..., :L].astype(jnp.float32)

    # Verify the fused Pallas conv path: tight vs. f32-accumulated conv on
    # bf16-rounded operands (only the final bf16 output rounding differs),
    # loose vs. the full f32 reference.
    ref_q = ref_in_layers(x, params["w_oik"], params["b"], params["dilations"],
                          quantize=True)
    assert bool(jnp.allclose(x_in_valid, ref_q, atol=2e-2, rtol=2e-2)), \
        "conv mismatch vs bf16-quantized reference"
    ref_f = ref_in_layers(x, params["w_oik"], params["b"], params["dilations"],
                          quantize=False)
    assert bool(jnp.allclose(x_in_valid, ref_f, atol=1e-1, rtol=1e-1)), \
        "conv mismatch vs f32 reference"

    print("KERNEL_OK")
</pallas_src>

<mosaic_0001>
module attributes {stable_mosaic.version = 11 : i64} {
  func.func @_wn_in_layers_kernel(%arg0: i32, %arg1: i32, %arg2: memref<1x32x128xf32, #tpu.memory_space<vmem>>, %arg3: memref<1x32x128xf32, #tpu.memory_space<vmem>>, %arg4: memref<1x32x128xf32, #tpu.memory_space<vmem>>, %arg5: memref<3x64x96xbf16, #tpu.memory_space<vmem>>, %arg6: memref<3x64x1xf32, #tpu.memory_space<vmem>>, %arg7: memref<3x1x64x128xbf16, #tpu.memory_space<vmem>>, %arg8: memref<32x260xbf16, #tpu.memory_space<vmem>>, %arg9: memref<2x96x128xbf16, #tpu.memory_space<vmem>>) attributes {dimension_semantics = [#tpu.dimension_semantics<parallel>, #tpu.dimension_semantics<parallel>], iteration_bounds = array<i64: 2, 1>, scalar_prefetch = 0 : i64, scratch_operands = 2 : i64, tpu.core_type = #tpu.core_type<tc>, window_params = [{transform_indices = @transform_0, window_bounds = array<i64: 1, 32, 128>}, {transform_indices = @transform_1, window_bounds = array<i64: 1, 32, 128>}, {transform_indices = @transform_2, window_bounds = array<i64: 1, 32, 128>}, {pipeline_mode = #tpu.pipeline_mode<synchronous>, transform_indices = @transform_3, window_bounds = array<i64: 3, 64, 96>}, {pipeline_mode = #tpu.pipeline_mode<synchronous>, transform_indices = @transform_4, window_bounds = array<i64: 3, 64, 1>}, {transform_indices = @transform_5, window_bounds = array<i64: 3, 1, 64, 128>}]} {
    %c0 = arith.constant 0 : index
    %c0_0 = arith.constant 0 : index
    %c0_1 = arith.constant 0 : index
    %0 = vector.load %arg2[%c0, %c0_0, %c0_1] : memref<1x32x128xf32, #tpu.memory_space<vmem>>, vector<1x32x128xf32>
    %1 = vector.shape_cast %0 : vector<1x32x128xf32> to vector<32x128xf32>
    %2 = arith.truncf %1 : vector<32x128xf32> to vector<32x128xbf16>
    %c0_2 = arith.constant 0 : index
    %c128 = arith.constant 128 : index
    %3 = vector.load %arg8[%c0_2, %c128] : memref<32x260xbf16, #tpu.memory_space<vmem>>, vector<32x128xbf16>
    tpu.vector_store %arg8[%c0_2, %c128], %2 {strides = array<i32>} : memref<32x260xbf16, #tpu.memory_space<vmem>>, vector<32x128xbf16>,
    %c0_3 = arith.constant 0 : index
    %c0_4 = arith.constant 0 : index
    %c124 = arith.constant 124 : index
    %4 = vector.load %arg3[%c0_3, %c0_4, %c124] : memref<1x32x128xf32, #tpu.memory_space<vmem>>, vector<1x32x4xf32>
    %5 = vector.shape_cast %4 : vector<1x32x4xf32> to vector<32x4xf32>
    %6 = arith.truncf %5 : vector<32x4xf32> to vector<32x4xbf16>
    %c0_i32 = arith.constant 0 : i32
    %7 = arith.cmpi eq, %arg1, %c0_i32 : i32
    %cst = arith.constant 0.000000e+00 : bf16
    %8 = vector.broadcast %cst : bf16 to vector<32x4xbf16>
    %9 = arith.select %7, %8, %6 : vector<32x4xbf16>
    %c0_5 = arith.constant 0 : index
    %c124_6 = arith.constant 124 : index
    %10 = vector.load %arg8[%c0_5, %c124_6] : memref<32x260xbf16, #tpu.memory_space<vmem>>, vector<32x4xbf16>
    tpu.vector_store %arg8[%c0_5, %c124_6], %9 {strides = array<i32>} : memref<32x260xbf16, #tpu.memory_space<vmem>>, vector<32x4xbf16>,
    %c0_7 = arith.constant 0 : index
    %c0_8 = arith.constant 0 : index
    %c0_9 = arith.constant 0 : index
    %11 = vector.load %arg4[%c0_7, %c0_8, %c0_9] : memref<1x32x128xf32, #tpu.memory_space<vmem>>, vector<1x32x4xf32>
    %12 = vector.shape_cast %11 : vector<1x32x4xf32> to vector<32x4xf32>
    %13 = arith.truncf %12 : vector<32x4xf32> to vector<32x4xbf16>
    %c0_i32_10 = arith.constant 0 : i32
    %14 = arith.cmpi eq, %arg1, %c0_i32_10 : i32
    %cst_11 = arith.constant 0.000000e+00 : bf16
    %15 = vector.broadcast %cst_11 : bf16 to vector<32x4xbf16>
    %16 = arith.select %14, %15, %13 : vector<32x4xbf16>
    %c0_12 = arith.constant 0 : index
    %c256 = arith.constant 256 : index
    %17 = vector.load %arg8[%c0_12, %c256] : memref<32x260xbf16, #tpu.memory_space<vmem>>, vector<32x4xbf16>
    tpu.vector_store %arg8[%c0_12, %c256], %16 {strides = array<i32>} : memref<32x260xbf16, #tpu.memory_space<vmem>>, vector<32x4xbf16>,
    %c0_13 = arith.constant 0 : index
    %c32 = arith.constant 32 : index
    %c0_14 = arith.constant 0 : index
    %18 = vector.load %arg9[%c0_13, %c32, %c0_14] : memref<2x96x128xbf16, #tpu.memory_space<vmem>>, vector<1x32x128xbf16>
    %19 = vector.shape_cast %18 : vector<1x32x128xbf16> to vector<32x128xbf16>
    %20 = vector.shape_cast %2 : vector<32x128xbf16> to vector<1x32x128xbf16>
    tpu.vector_store %arg9[%c0_13, %c32, %c0_14], %20 {strides = array<i32>} : memref<2x96x128xbf16, #tpu.memory_space<vmem>>, vector<1x32x128xbf16>,
    %c1 = arith.constant 1 : index
    %c32_15 = arith.constant 32 : index
    %c0_16 = arith.constant 0 : index
    %21 = vector.load %arg9[%c1, %c32_15, %c0_16] : memref<2x96x128xbf16, #tpu.memory_space<vmem>>, vector<1x32x128xbf16>
    %22 = vector.shape_cast %21 : vector<1x32x128xbf16> to vector<32x128xbf16>
    %23 = vector.shape_cast %2 : vector<32x128xbf16> to vector<1x32x128xbf16>
    tpu.vector_store %arg9[%c1, %c32_15, %c0_16], %23 {strides = array<i32>} : memref<2x96x128xbf16, #tpu.memory_space<vmem>>, vector<1x32x128xbf16>,
    %c0_17 = arith.constant 0 : index
    %c127 = arith.constant 127 : index
    %24 = vector.load %arg8[%c0_17, %c127] : memref<32x260xbf16, #tpu.memory_space<vmem>>, vector<32x128xbf16>
    %c0_18 = arith.constant 0 : index
    %c0_19 = arith.constant 0 : index
    %c0_20 = arith.constant 0 : index
    %25 = vector.load %arg9[%c0_18, %c0_19, %c0_20] : memref<2x96x128xbf16, #tpu.memory_space<vmem>>, vector<1x32x128xbf16>
    %26 = vector.shape_cast %25 : vector<1x32x128xbf16> to vector<32x128xbf16>
    %27 = vector.shape_cast %24 : vector<32x128xbf16> to vector<1x32x128xbf16>
    tpu.vector_store %arg9[%c0_18, %c0_19, %c0_20], %27 {strides = array<i32>} : memref<2x96x128xbf16, #tpu.memory_space<vmem>>, vector<1x32x128xbf16>,
    %c0_21 = arith.constant 0 : index
    %c129 = arith.constant 129 : index
    %28 = vector.load %arg8[%c0_21, %c129] : memref<32x260xbf16, #tpu.memory_space<vmem>>, vector<32x128xbf16>
    %c0_22 = arith.constant 0 : index
    %c64 = arith.constant 64 : index
    %c0_23 = arith.constant 0 : index
    %29 = vector.load %arg9[%c0_22, %c64, %c0_23] : memref<2x96x128xbf16, #tpu.memory_space<vmem>>, vector<1x32x128xbf16>
    %30 = vector.shape_cast %29 : vector<1x32x128xbf16> to vector<32x128xbf16>
    %31 = vector.shape_cast %28 : vector<32x128xbf16> to vector<1x32x128xbf16>
    tpu.vector_store %arg9[%c0_22, %c64, %c0_23], %31 {strides = array<i32>} : memref<2x96x128xbf16, #tpu.memory_space<vmem>>, vector<1x32x128xbf16>,
    %c0_24 = arith.constant 0 : index
    %c0_25 = arith.constant 0 : index
    %c0_26 = arith.constant 0 : index
    %32 = vector.load %arg5[%c0_24, %c0_25, %c0_26] : memref<3x64x96xbf16, #tpu.memory_space<vmem>>, vector<1x64x96xbf16>
    %33 = vector.shape_cast %32 : vector<1x64x96xbf16> to vector<64x96xbf16>
    %c0_27 = arith.constant 0 : index
    %c0_28 = arith.constant 0 : index
    %c0_29 = arith.constant 0 : index
    %34 = vector.load %arg9[%c0_27, %c0_28, %c0_29] : memref<2x96x128xbf16, #tpu.memory_space<vmem>>, vector<1x96x128xbf16>
    %35 = vector.shape_cast %34 : vector<1x96x128xbf16> to vector<96x128xbf16>
    %cst_30 = arith.constant dense<0.000000e+00> : vector<64x128xf32>
    %36 = tpu.matmul %33, %35, %cst_30 {dimension_numbers = #tpu.dot_dimension_numbers<[1], [0], [0], [1], [0, 0, 1, 1], [], []>} : vector<64x96xbf16>, vector<96x128xbf16>, vector<64x128xf32> -> vector<64x128xf32>
    %c0_31 = arith.constant 0 : index
    %c0_32 = arith.constant 0 : index
    %c0_33 = arith.constant 0 : index
    %37 = vector.load %arg6[%c0_31, %c0_32, %c0_33] : memref<3x64x1xf32, #tpu.memory_space<vmem>>, vector<1x64x1xf32>
    %38 = vector.shape_cast %37 : vector<1x64x1xf32> to vector<64x1xf32>
    %39 = vector.broadcast %38 : vector<64x1xf32> to vector<64x128xf32>
    %40 = arith.addf %36, %39 : vector<64x128xf32>
    %41 = arith.truncf %40 : vector<64x128xf32> to vector<64x128xbf16>
    %c0_34 = arith.constant 0 : index
    %c0_35 = arith.constant 0 : index
    %c0_36 = arith.constant 0 : index
    %c0_37 = arith.constant 0 : index
    %42 = vector.load %arg7[%c0_34, %c0_35, %c0_36, %c0_37] : memref<3x1x64x128xbf16, #tpu.memory_space<vmem>>, vector<1x1x64x128xbf16>
    %43 = vector.shape_cast %42 : vector<1x1x64x128xbf16> to vector<64x128xbf16>
    %44 = vector.shape_cast %41 : vector<64x128xbf16> to vector<1x1x64x128xbf16>
    tpu.vector_store %arg7[%c0_34, %c0_35, %c0_36, %c0_37], %44 {strides = array<i32>} : memref<3x1x64x128xbf16, #tpu.memory_space<vmem>>, vector<1x1x64x128xbf16>,
    %c0_38 = arith.constant 0 : index
    %c126 = arith.constant 126 : index
    %45 = vector.load %arg8[%c0_38, %c126] : memref<32x260xbf16, #tpu.memory_space<vmem>>, vector<32x128xbf16>
    %c1_39 = arith.constant 1 : index
    %c0_40 = arith.constant 0 : index
    %c0_41 = arith.constant 0 : index
    %46 = vector.load %arg9[%c1_39, %c0_40, %c0_41] : memref<2x96x128xbf16, #tpu.memory_space<vmem>>, vector<1x32x128xbf16>
    %47 = vector.shape_cast %46 : vector<1x32x128xbf16> to vector<32x128xbf16>
    %48 = vector.shape_cast %45 : vector<32x128xbf16> to vector<1x32x128xbf16>
    tpu.vector_store %arg9[%c1_39, %c0_40, %c0_41], %48 {strides = array<i32>} : memref<2x96x128xbf16, #tpu.memory_space<vmem>>, vector<1x32x128xbf16>,
    %c0_42 = arith.constant 0 : index
    %c130 = arith.constant 130 : index
    %49 = vector.load %arg8[%c0_42, %c130] : memref<32x260xbf16, #tpu.memory_space<vmem>>, vector<32x128xbf16>
    %c1_43 = arith.constant 1 : index
    %c64_44 = arith.constant 64 : index
    %c0_45 = arith.constant 0 : index
    %50 = vector.load %arg9[%c1_43, %c64_44, %c0_45] : memref<2x96x128xbf16, #tpu.memory_space<vmem>>, vector<1x32x128xbf16>
    %51 = vector.shape_cast %50 : vector<1x32x128xbf16> to vector<32x128xbf16>
    %52 = vector.shape_cast %49 : vector<32x128xbf16> to vector<1x32x128xbf16>
    tpu.vector_store %arg9[%c1_43, %c64_44, %c0_45], %52 {strides = array<i32>} : memref<2x96x128xbf16, #tpu.memory_space<vmem>>, vector<1x32x128xbf16>,
    %c1_46 = arith.constant 1 : index
    %c0_47 = arith.constant 0 : index
    %c0_48 = arith.constant 0 : index
    %53 = vector.load %arg5[%c1_46, %c0_47, %c0_48] : memref<3x64x96xbf16, #tpu.memory_space<vmem>>, vector<1x64x96xbf16>
    %54 = vector.shape_cast %53 : vector<1x64x96xbf16> to vector<64x96xbf16>
    %c1_49 = arith.constant 1 : index
    %c0_50 = arith.constant 0 : index
    %c0_51 = arith.constant 0 : index
    %55 = vector.load %arg9[%c1_49, %c0_50, %c0_51] : memref<2x96x128xbf16, #tpu.memory_space<vmem>>, vector<1x96x128xbf16>
    %56 = vector.shape_cast %55 : vector<1x96x128xbf16> to vector<96x128xbf16>
    %cst_52 = arith.constant dense<0.000000e+00> : vector<64x128xf32>
    %57 = tpu.matmul %54, %56, %cst_52 {dimension_numbers = #tpu.dot_dimension_numbers<[1], [0], [0], [1], [0, 0, 1, 1], [], []>} : vector<64x96xbf16>, vector<96x128xbf16>, vector<64x128xf32> -> vector<64x128xf32>
    %c1_53 = arith.constant 1 : index
    %c0_54 = arith.constant 0 : index
    %c0_55 = arith.constant 0 : index
    %58 = vector.load %arg6[%c1_53, %c0_54, %c0_55] : memref<3x64x1xf32, #tpu.memory_space<vmem>>, vector<1x64x1xf32>
    %59 = vector.shape_cast %58 : vector<1x64x1xf32> to vector<64x1xf32>
    %60 = vector.broadcast %59 : vector<64x1xf32> to vector<64x128xf32>
    %61 = arith.addf %57, %60 : vector<64x128xf32>
    %62 = arith.truncf %61 : vector<64x128xf32> to vector<64x128xbf16>
    %c1_56 = arith.constant 1 : index
    %c0_57 = arith.constant 0 : index
    %c0_58 = arith.constant 0 : index
    %c0_59 = arith.constant 0 : index
    %63 = vector.load %arg7[%c1_56, %c0_57, %c0_58, %c0_59] : memref<3x1x64x128xbf16, #tpu.memory_space<vmem>>, vector<1x1x64x128xbf16>
    %64 = vector.shape_cast %63 : vector<1x1x64x128xbf16> to vector<64x128xbf16>
    %65 = vector.shape_cast %62 : vector<64x128xbf16> to vector<1x1x64x128xbf16>
    tpu.vector_store %arg7[%c1_56, %c0_57, %c0_58, %c0_59], %65 {strides = array<i32>} : memref<3x1x64x128xbf16, #tpu.memory_space<vmem>>, vector<1x1x64x128xbf16>,
    %c0_60 = arith.constant 0 : index
    %c124_61 = arith.constant 124 : index
    %66 = vector.load %arg8[%c0_60, %c124_61] : memref<32x260xbf16, #tpu.memory_space<vmem>>, vector<32x128xbf16>
    %c0_62 = arith.constant 0 : index
    %c0_63 = arith.constant 0 : index
    %c0_64 = arith.constant 0 : index
    %67 = vector.load %arg9[%c0_62, %c0_63, %c0_64] : memref<2x96x128xbf16, #tpu.memory_space<vmem>>, vector<1x32x128xbf16>
    %68 = vector.shape_cast %67 : vector<1x32x128xbf16> to vector<32x128xbf16>
    %69 = vector.shape_cast %66 : vector<32x128xbf16> to vector<1x32x128xbf16>
    tpu.vector_store %arg9[%c0_62, %c0_63, %c0_64], %69 {strides = array<i32>} : memref<2x96x128xbf16, #tpu.memory_space<vmem>>, vector<1x32x128xbf16>,
    %c0_65 = arith.constant 0 : index
    %c132 = arith.constant 132 : index
    %70 = vector.load %arg8[%c0_65, %c132] : memref<32x260xbf16, #tpu.memory_space<vmem>>, vector<32x128xbf16>
    %c0_66 = arith.constant 0 : index
    %c64_67 = arith.constant 64 : index
    %c0_68 = arith.constant 0 : index
    %71 = vector.load %arg9[%c0_66, %c64_67, %c0_68] : memref<2x96x128xbf16, #tpu.memory_space<vmem>>, vector<1x32x128xbf16>
    %72 = vector.shape_cast %71 : vector<1x32x128xbf16> to vector<32x128xbf16>
    %73 = vector.shape_cast %70 : vector<32x128xbf16> to vector<1x32x128xbf16>
    tpu.vector_store %arg9[%c0_66, %c64_67, %c0_68], %73 {strides = array<i32>} : memref<2x96x128xbf16, #tpu.memory_space<vmem>>, vector<1x32x128xbf16>,
    %c2 = arith.constant 2 : index
    %c0_69 = arith.constant 0 : index
    %c0_70 = arith.constant 0 : index
    %74 = vector.load %arg5[%c2, %c0_69, %c0_70] : memref<3x64x96xbf16, #tpu.memory_space<vmem>>, vector<1x64x96xbf16>
    %75 = vector.shape_cast %74 : vector<1x64x96xbf16> to vector<64x96xbf16>
    %c0_71 = arith.constant 0 : index
    %c0_72 = arith.constant 0 : index
    %c0_73 = arith.constant 0 : index
    %76 = vector.load %arg9[%c0_71, %c0_72, %c0_73] : memref<2x96x128xbf16, #tpu.memory_space<vmem>>, vector<1x96x128xbf16>
    %77 = vector.shape_cast %76 : vector<1x96x128xbf16> to vector<96x128xbf16>
    %cst_74 = arith.constant dense<0.000000e+00> : vector<64x128xf32>
    %78 = tpu.matmul %75, %77, %cst_74 {dimension_numbers = #tpu.dot_dimension_numbers<[1], [0], [0], [1], [0, 0, 1, 1], [], []>} : vector<64x96xbf16>, vector<96x128xbf16>, vector<64x128xf32> -> vector<64x128xf32>
    %c2_75 = arith.constant 2 : index
    %c0_76 = arith.constant 0 : index
    %c0_77 = arith.constant 0 : index
    %79 = vector.load %arg6[%c2_75, %c0_76, %c0_77] : memref<3x64x1xf32, #tpu.memory_space<vmem>>, vector<1x64x1xf32>
    %80 = vector.shape_cast %79 : vector<1x64x1xf32> to vector<64x1xf32>
    %81 = vector.broadcast %80 : vector<64x1xf32> to vector<64x128xf32>
    %82 = arith.addf %78, %81 : vector<64x128xf32>
    %83 = arith.truncf %82 : vector<64x128xf32> to vector<64x128xbf16>
    %c2_78 = arith.constant 2 : index
    %c0_79 = arith.constant 0 : index
    %c0_80 = arith.constant 0 : index
    %c0_81 = arith.constant 0 : index
    %84 = vector.load %arg7[%c2_78, %c0_79, %c0_80, %c0_81] : memref<3x1x64x128xbf16, #tpu.memory_space<vmem>>, vector<1x1x64x128xbf16>
    %85 = vector.shape_cast %84 : vector<1x1x64x128xbf16> to vector<64x128xbf16>
    %86 = vector.shape_cast %83 : vector<64x128xbf16> to vector<1x1x64x128xbf16>
    tpu.vector_store %arg7[%c2_78, %c0_79, %c0_80, %c0_81], %86 {strides = array<i32>} : memref<3x1x64x128xbf16, #tpu.memory_space<vmem>>, vector<1x1x64x128xbf16>,
    return
  }
  func.func @transform_0(%arg0: i32, %arg1: i32) -> (i32, i32, i32) {
    %c0_i32 = arith.constant 0 : i32
    %c0_i32_0 = arith.constant 0 : i32
    return %arg0, %c0_i32, %arg1 : i32, i32, i32
  }
  func.func @transform_1(%arg0: i32, %arg1: i32) -> (i32, i32, i32) {
    %c1_i32 = arith.constant 1 : i32
    %0 = arith.subi %arg1, %c1_i32 : i32
    %c0_i32 = arith.constant 0 : i32
    %1 = arith.maxsi %0, %c0_i32 : i32
    %c0_i32_0 = arith.constant 0 : i32
    %c0_i32_1 = arith.constant 0 : i32
    return %arg0, %c0_i32_0, %1 : i32, i32, i32
  }
  func.func @transform_2(%arg0: i32, %arg1: i32) -> (i32, i32, i32) {
    %c1_i32 = arith.constant 1 : i32
    %0 = arith.addi %arg1, %c1_i32 : i32
    %c0_i32 = arith.constant 0 : i32
    %1 = arith.minsi %0, %c0_i32 : i32
    %c0_i32_0 = arith.constant 0 : i32
    %c0_i32_1 = arith.constant 0 : i32
    return %arg0, %c0_i32_0, %1 : i32, i32, i32
  }
  func.func @transform_3(%arg0: i32, %arg1: i32) -> (i32, i32, i32) {
    %c0_i32 = arith.constant 0 : i32
    %c0_i32_0 = arith.constant 0 : i32
    %c0_i32_1 = arith.constant 0 : i32
    %c0_i32_2 = arith.constant 0 : i32
    return %c0_i32, %c0_i32_0, %c0_i32_1 : i32, i32, i32
  }
  func.func @transform_4(%arg0: i32, %arg1: i32) -> (i32, i32, i32) {
    %c0_i32 = arith.constant 0 : i32
    %c0_i32_0 = arith.constant 0 : i32
    %c0_i32_1 = arith.constant 0 : i32
    %c0_i32_2 = arith.constant 0 : i32
    return %c0_i32, %c0_i32_0, %c0_i32_1 : i32, i32, i32
  }
  func.func @transform_5(%arg0: i32, %arg1: i32) -> (i32, i32, i32, i32) {
    %c0_i32 = arith.constant 0 : i32
    %c0_i32_0 = arith.constant 0 : i32
    %c0_i32_1 = arith.constant 0 : i32
    return %c0_i32, %arg0, %c0_i32_0, %arg1 : i32, i32, i32, i32
  }
}

</mosaic_0001>

<llo_original>
// kernel: tpu_custom_call.1
$region0: #{tpu_custom_call.1}
  #allocation0 [shape = 'u32[]', space=smem, size = 0x4, offset = 0x4, fixed_abs, tag = 'smem constant byte address 0x4 - core index']
  #allocation1 [shape = 'u32[144,128]{1,0:T(1,128)}', space=vmem, size = 0x12000, scoped, tag = 'internal scratch']
  #allocation2 [shape = 'bf16[32,260]{1,0:T(16,128)(2,1)}', space=vmem, size = 0x6000, scoped, tag = 'scratch operand']
  #allocation3 [shape = 'bf16[2,96,128]{2,1,0:T(16,128)(2,1)}', space=vmem, size = 0xc000, scoped, tag = 'scratch operand']
  #allocation10 [shape = 's32[]', space=sflag, size = 0x4, offset = 0, fixed_abs, tag = 'sflag constant byte address 0x0 - dummy sync flag']
  %s0 = inlined_call_operand.vmem [shape: f32[2,32,128], index: 0, kind: input, shape index: {}]
  %s1 = inlined_call_operand.hbm [shape: f32[2,32,128], index: 1, kind: input, shape index: {}]
  %s2 = inlined_call_operand.hbm [shape: f32[2,32,128], index: 2, kind: input, shape index: {}]
  %s3 = inlined_call_operand.vmem [shape: bf16[3,64,96], index: 3, kind: input, shape index: {}]
  %s4 = inlined_call_operand.vmem [shape: f32[3,64,1], index: 4, kind: input, shape index: {}]
  %s5 = inlined_call_operand.hbm [shape: bf16[3,2,64,128], index: 5, kind: output, shape index: {}]
  %s6 = sld [smem:[#allocation0]]
  $region61: #{tpu_custom_call.1} parent=0
    _
  %s8 = ssub.s32 1, %s6
  %s9 = scalar_select 0, %s8, %s6
  $region1: #{tpu_custom_call.1} parent=0
    #allocation4 [shape = 'u8[32768]{0}', space=vmem, size = 0x8000, scoped, tag = 'input window, operand 1']
    #allocation5 [shape = 's32[2]{0}', space=sflag, size = 0x8, scoped, tag = 'scoped memory for tpu_custom_call.1']
    #allocation6 [shape = 's32[2]{0}', space=sflag, size = 0x8, scoped, tag = 'scoped memory for tpu_custom_call.1']
    #allocation7 [shape = 'u8[32768]{0}', space=vmem, size = 0x8000, scoped, tag = 'input window, operand 2']
    #allocation8 [shape = 's32[2]{0}', space=sflag, size = 0x8, scoped, tag = 'scoped memory for tpu_custom_call.1']
    #allocation9 [shape = 'u8[98304]{0}', space=vmem, size = 0x18000, scoped, tag = 'output window, operand 0']
    %10 = vsyncpa [#allocation5], 0
    %s11 = scalar_lea.sflag [#allocation5], 1
    %12 = vsyncpa %s11, 0
    %13 = vsyncpa [#allocation8], 0
    %s14 = scalar_lea.sflag [#allocation8], 1
    %15 = vsyncpa %s14, 0
    %16 = vsyncpa [#allocation6], 0
    %s17 = scalar_lea.sflag [#allocation6], 1
    %18 = vsyncpa %s17, 0
    loop: start=0, step=1, limit=4
    $region2: #{tpu_custom_call.1} parent=1 // loop_pre_header
      _
    $region3: #{tpu_custom_call.1} parent=1 // loop_header
      %s20 = sphi 0, %s24
      %p21 = scmp.ge.s32.totalorder %s20, 4
      %s27 = sphi 0, %s39
      %s28 = sphi 0, %s35
      %s29 = sphi 0, %s27
      %s30 = sphi 0, %s28
      %s31 = sphi 0, %s29
      %s32 = sphi 0, %s30
      %s44 = sphi 0, %s46
      %s47 = sphi 0, %s44
      %s48 = sphi 0, %s47
      %s64 = sphi 0, %s48
      %s78 = sphi 0, %s80
      %s81 = sphi 0, %s78
      %s82 = sphi 0, %s81
      %s98 = sphi 0, %s82
      %s112 = sphi 0, %s114
      %s115 = sphi 0, %s112
      %s116 = sphi 0, %s115
      %s132 = sphi 0, %s116
      %s136 = sphi 0, %s136
      %s138 = sphi 0, %s136
      %s139 = sphi 0, %s138
      %s153 = sphi 0, %s139
      %s157 = sphi 0, %s157
      %s159 = sphi 0, %s157
      %s160 = sphi 0, %s159
      %s174 = sphi 0, %s160
      %s182 = sphi 0, %s184
      %s185 = sphi 0, %s182
      %s186 = sphi 0, %s185
      %s202 = sphi 0, %s186
    $region4: #{tpu_custom_call.1} parent=1 // loop_header_branch
      %23 = sbr.rel (%p21) target = $region8
    $region5: #{tpu_custom_call.1} parent=1 // loop_body
      %s25 = ssub.s32 %s20, 1
      %s26 = ssub.s32 %s20, 2
      %s33 = sadd.s32 1, %s28
      %p34 = scmp.ge.s32.totalorder %s33, 1
      %s35 = scalar_select %p34, 0, %s33
      %s36 = sadd.s32 1, %s27
      %s37 = scalar_select %p34, %s36, %s27
      %p38 = scmp.ge.s32.totalorder %s37, 2
      %s39 = scalar_select %p38, 0, %s37
      %s40 = ssub.s32 %s27, %s39
      %s41 = ssub.s32 %s28, %s35
      %s42 = sor.u32 %s40, %s41
      %p43 = scmp.eq.s32.totalorder %s42, 0
      %s45 = sadd.s32 %s44, 1
      %s46 = scalar_select %p43, %s44, %s45
      %p49 = pneg %p43
      %p50 = scmp.eq.s32.totalorder %s20, 1
      %p51 = por %p49, %p50
      %p52 = scmp.ne.s32.totalorder %s44, %s47
      %p53 = scmp.eq.s32.totalorder %s20, 0
      %p54 = por %p52, %p53
      %p55 = scmp.ne.s32.totalorder %s44, %s47
      %p56 = scmp.eq.s32.totalorder %s25, 1
      %p57 = por %p55, %p56
      %p58 = scmp.ne.s32.totalorder %s47, %s48
      %p59 = scmp.eq.s32.totalorder %s25, 0
      %p60 = por %p58, %p59
      %p61 = scmp.ne.s32.totalorder %s47, %s48
      %p62 = scmp.eq.s32.totalorder %s26, 1
      %p63 = por %p61, %p62
      %p65 = scmp.ne.s32.totalorder %s48, %s64
      %p66 = scmp.eq.s32.totalorder %s26, 0
      %p67 = por %p65, %p66
      %s68 = ssub.s32 %s28, 1
      %p69 = scmp.gt.s32.totalorder %s68, 0
      %s70 = scalar_select %p69, %s68, 0
      %s71 = ssub.s32 %s35, 1
      %p72 = scmp.gt.s32.totalorder %s71, 0
      %s73 = scalar_select %p72, %s71, 0
      %s74 = ssub.s32 %s27, %s39
      %s75 = ssub.s32 %s70, %s73
      %s76 = sor.u32 %s74, %s75
      %p77 = scmp.eq.s32.totalorder %s76, 0
      %s79 = sadd.s32 %s78, 1
      %s80 = scalar_select %p77, %s78, %s79
      %p83 = pneg %p77
      %p84 = scmp.eq.s32.totalorder %s20, 1
      %p85 = por %p83, %p84
      %p86 = scmp.ne.s32.totalorder %s78, %s81
      %p87 = scmp.eq.s32.totalorder %s20, 0
      %p88 = por %p86, %p87
      %p89 = scmp.ne.s32.totalorder %s78, %s81
      %p90 = scmp.eq.s32.totalorder %s25, 1
      %p91 = por %p89, %p90
      %p92 = scmp.ne.s32.totalorder %s81, %s82
      %p93 = scmp.eq.s32.totalorder %s25, 0
      %p94 = por %p92, %p93
      %p95 = scmp.ne.s32.totalorder %s81, %s82
      %p96 = scmp.eq.s32.totalorder %s26, 1
      %p97 = por %p95, %p96
      %p99 = scmp.ne.s32.totalorder %s82, %s98
      %p100 = scmp.eq.s32.totalorder %s26, 0
      %p101 = por %p99, %p100
      %s102 = sadd.s32 %s28, 1
      %p103 = scmp.lt.s32.totalorder %s102, 0
      %s104 = scalar_select %p103, %s102, 0
      %s105 = sadd.s32 %s35, 1
      %p106 = scmp.lt.s32.totalorder %s105, 0
      %s107 = scalar_select %p106, %s105, 0
      %s108 = ssub.s32 %s27, %s39
      %s109 = ssub.s32 %s104, %s107
      %s110 = sor.u32 %s108, %s109
      %p111 = scmp.eq.s32.totalorder %s110, 0
      %s113 = sadd.s32 %s112, 1
      %s114 = scalar_select %p111, %s112, %s113
      %p117 = pneg %p111
      %p118 = scmp.eq.s32.totalorder %s20, 1
      %p119 = por %p117, %p118
      %p120 = scmp.ne.s32.totalorder %s112, %s115
      %p121 = scmp.eq.s32.totalorder %s20, 0
      %p122 = por %p120, %p121
      %p123 = scmp.ne.s32.totalorder %s112, %s115
      %p124 = scmp.eq.s32.totalorder %s25, 1
      %p125 = por %p123, %p124
      %p126 = scmp.ne.s32.totalorder %s115, %s116
      %p127 = scmp.eq.s32.totalorder %s25, 0
      %p128 = por %p126, %p127
      %p129 = scmp.ne.s32.totalorder %s115, %s116
      %p130 = scmp.eq.s32.totalorder %s26, 1
      %p131 = por %p129, %p130
      %p133 = scmp.ne.s32.totalorder %s116, %s132
      %p134 = scmp.eq.s32.totalorder %s26, 0
      %p135 = por %p133, %p134
      %s137 = sadd.s32 %s136, 1
      %p140 = scmp.eq.s32.totalorder %s20, 1
      %p141 = scmp.ne.s32.totalorder %s136, %s138
      %p142 = scmp.eq.s32.totalorder %s20, 0
      %p143 = por %p141, %p142
      %p144 = scmp.ne.s32.totalorder %s136, %s138
      %p145 = scmp.eq.s32.totalorder %s25, 1
      %p146 = por %p144, %p145
      %p147 = scmp.ne.s32.totalorder %s138, %s139
      %p148 = scmp.eq.s32.totalorder %s25, 0
      %p149 = por %p147, %p148
      %p150 = scmp.ne.s32.totalorder %s138, %s139
      %p151 = scmp.eq.s32.totalorder %s26, 1
      %p152 = por %p150, %p151
      %p154 = scmp.ne.s32.totalorder %s139, %s153
      %p155 = scmp.eq.s32.totalorder %s26, 0
      %p156 = por %p154, %p155
      %s158 = sadd.s32 %s157, 1
      %p161 = scmp.eq.s32.totalorder %s20, 1
      %p162 = scmp.ne.s32.totalorder %s157, %s159
      %p163 = scmp.eq.s32.totalorder %s20, 0
      %p164 = por %p162, %p163
      %p165 = scmp.ne.s32.totalorder %s157, %s159
      %p166 = scmp.eq.s32.totalorder %s25, 1
      %p167 = por %p165, %p166
      %p168 = scmp.ne.s32.totalorder %s159, %s160
      %p169 = scmp.eq.s32.totalorder %s25, 0
      %p170 = por %p168, %p169
      %p171 = scmp.ne.s32.totalorder %s159, %s160
      %p172 = scmp.eq.s32.totalorder %s26, 1
      %p173 = por %p171, %p172
      %p175 = scmp.ne.s32.totalorder %s160, %s174
      %p176 = scmp.eq.s32.totalorder %s26, 0
      %p177 = por %p175, %p176
      %s178 = ssub.s32 %s27, %s39
      %s179 = ssub.s32 %s28, %s35
      %s180 = sor.u32 %s178, %s179
      %p181 = scmp.eq.s32.totalorder %s180, 0
      %s183 = sadd.s32 %s182, 1
      %s184 = scalar_select %p181, %s182, %s183
      %p187 = pneg %p181
      %p188 = scmp.eq.s32.totalorder %s20, 1
      %p189 = por %p187, %p188
      %p190 = scmp.ne.s32.totalorder %s182, %s185
      %p191 = scmp.eq.s32.totalorder %s20, 0
      %p192 = por %p190, %p191
      %p193 = scmp.ne.s32.totalorder %s182, %s185
      %p194 = scmp.eq.s32.totalorder %s25, 1
      %p195 = por %p193, %p194
      %p196 = scmp.ne.s32.totalorder %s185, %s186
      %p197 = scmp.eq.s32.totalorder %s25, 0
      %p198 = por %p196, %p197
      %p199 = scmp.ne.s32.totalorder %s185, %s186
      %p200 = scmp.eq.s32.totalorder %s26, 1
      %p201 = por %p199, %p200
      %p203 = scmp.ne.s32.totalorder %s186, %s202
      %p204 = scmp.eq.s32.totalorder %s26, 0
      %p205 = por %p203, %p204
      %p206 = scmp.le.s32.totalorder 1, %s20
      %p207 = scmp.lt.s32.totalorder %s20, 3
      %p208 = pnand %p206, %p207
      %p209 = pneg %p208
      // Predicated region
      $region9: #{tpu_custom_call.1} parent=5 // pred_check
        _
      $region10: #{tpu_custom_call.1} parent=5 // pred_check_branch
        %211 = sbr.rel (%p208) target = $region12
      $region11: #{tpu_custom_call.1} parent=5 // pred_region
        %s212 = ssub.s32 %s20, 1
        // Predicated region
        $region13: #{tpu_custom_call.1} parent=11 // pred_check
          %p213 = pneg %p149
        $region14: #{tpu_custom_call.1} parent=11 // pred_check_branch
          %215 = sbr.rel (%p213) target = $region16
        $region15: #{tpu_custom_call.1} parent=11 // pred_region
          _
        $region16: #{tpu_custom_call.1} parent=11 // pred_fallthru
          _
        // Predicated region
        $region17: #{tpu_custom_call.1} parent=11 // pred_check
          %p216 = pneg %p170
        $region18: #{tpu_custom_call.1} parent=11 // pred_check_branch
          %218 = sbr.rel (%p216) target = $region20
        $region19: #{tpu_custom_call.1} parent=11 // pred_region
          _
        $region20: #{tpu_custom_call.1} parent=11 // pred_fallthru
          _
      $region12: #{tpu_custom_call.1} parent=5 // pred_fallthru
        _
      %p219 = scmp.lt.s32.totalorder %s20, 2
      // Predicated region
      $region21: #{tpu_custom_call.1} parent=5 // pred_check
        %p220 = pneg %p219
      $region22: #{tpu_custom_call.1} parent=5 // pred_check_branch
        %222 = sbr.rel (%p220) target = $region24
      $region23: #{tpu_custom_call.1} parent=5 // pred_region
        // Predicated region
        $region25: #{tpu_custom_call.1} parent=23 // pred_check
          %p223 = pneg %p54
        $region26: #{tpu_custom_call.1} parent=23 // pred_check_branch
          %225 = sbr.rel (%p223) target = $region28
        $region27: #{tpu_custom_call.1} parent=23 // pred_region
          %p226 = scmp.lt.s32.totalorder %s27, 1
          %s227 = scalar_select %p226, %s27, 1
          %p228 = scmp.lt.s32.totalorder %s28, 0
          %s229 = scalar_select %p228, %s28, 0
          %s230 = smul.addr %s227, 4
          %s231 = sadd.s32 %s229, %s230
          %s232 = smul.addr %s231, 8
          %s233 = scalar_lea.vmem %s0, %s232
        $region28: #{tpu_custom_call.1} parent=23 // pred_fallthru
          _
        // Predicated region
        $region29: #{tpu_custom_call.1} parent=23 // pred_check
          %p234 = pneg %p88
        $region30: #{tpu_custom_call.1} parent=23 // pred_check_branch
          %236 = sbr.rel (%p234) target = $region32
        $region31: #{tpu_custom_call.1} parent=23 // pred_region
          %s237 = sand.u32 %s78, 1
          %s238 = scalar_lea.sflag [#allocation5], %s237
          %s239 = sand.u32 %s78, 1
          %s240 = smul.addr %s239, 32
          %s241 = scalar_lea.vmem [#allocation4], %s240
          %s242 = ssub.s32 %s28, 1
          %p243 = scmp.gt.s32.totalorder %s242, 0
          %s244 = scalar_select %p243, %s242, 0
          %s246 = ssub.s32 512, 512
          %247 = vsyncadd %s238, %s246
          %s248 = smul.addr %s27, 4
          %s249 = sadd.s32 %s244, %s248
          %s250 = smul.addr %s249, 128
          %s251 = scalar_lea.hbm %s1, %s250
          %s252 = sshll.u32 %s241, 4
          %s253 = int_to_ptr.vmem [resolvable:$true] %s252
          %258 = dma.hbm_to_vmem [thread:$0]  %s251, 512, %s253, %s238, 128, 128, 8
        $region32: #{tpu_custom_call.1} parent=23 // pred_fallthru
          _
        // Predicated region
        $region33: #{tpu_custom_call.1} parent=23 // pred_check
          %p259 = pneg %p122
        $region34: #{tpu_custom_call.1} parent=23 // pred_check_branch
          %261 = sbr.rel (%p259) target = $region36
        $region35: #{tpu_custom_call.1} parent=23 // pred_region
          %s262 = sand.u32 %s112, 1
          %s263 = scalar_lea.sflag [#allocation8], %s262
          %s264 = sand.u32 %s112, 1
          %s265 = smul.addr %s264, 32
          %s266 = scalar_lea.vmem [#allocation7], %s265
          %s267 = sadd.s32 %s28, 1
          %p268 = scmp.lt.s32.totalorder %s267, 0
          %s269 = scalar_select %p268, %s267, 0
          %s271 = ssub.s32 512, 512
          %272 = vsyncadd %s263, %s271
          %s273 = smul.addr %s27, 4
          %s274 = sadd.s32 %s269, %s273
          %s275 = smul.addr %s274, 128
          %s276 = scalar_lea.hbm %s2, %s275
          %s277 = sshll.u32 %s266, 4
          %s278 = int_to_ptr.vmem [resolvable:$true] %s277
          %283 = dma.hbm_to_vmem [thread:$0]  %s276, 512, %s278, %s263, 128, 128, 8
        $region36: #{tpu_custom_call.1} parent=23 // pred_fallthru
          _
      $region24: #{tpu_custom_call.1} parent=5 // pred_fallthru
        _
      %p284 = scmp.le.s32.totalorder 1, %s20
      %p285 = scmp.lt.s32.totalorder %s20, 3
      %p286 = pnand %p284, %p285
      %p287 = pneg %p286
      // Predicated region
      $region37: #{tpu_custom_call.1} parent=5 // pred_check
        _
      $region38: #{tpu_custom_call.1} parent=5 // pred_check_branch
        %289 = sbr.rel (%p286) target = $region40
      $region39: #{tpu_custom_call.1} parent=5 // pred_region
        %s290 = ssub.s32 %s20, 1
        %s291 = sand.u32 %s81, 1
        %s292 = scalar_lea.sflag [#allocation5], %s291
        %s293 = sand.u32 %s81, 1
        %s294 = smul.addr %s293, 32
        %s295 = scalar_lea.vmem [#allocation4], %s294
        // Predicated region
        $region41: #{tpu_custom_call.1} parent=39 // pred_check
          %p296 = pneg %p94
        $region42: #{tpu_custom_call.1} parent=39 // pred_check_branch
          %298 = sbr.rel (%p296) target = $region44
        $region43: #{tpu_custom_call.1} parent=39 // pred_region
          %299 = dma.done %s292, 512
        $region44: #{tpu_custom_call.1} parent=39 // pred_fallthru
          _
        %s300 = sand.u32 %s115, 1
        %s301 = scalar_lea.sflag [#allocation8], %s300
        %s302 = sand.u32 %s115, 1
        %s303 = smul.addr %s302, 32
        %s304 = scalar_lea.vmem [#allocation7], %s303
        // Predicated region
        $region45: #{tpu_custom_call.1} parent=39 // pred_check
          %p305 = pneg %p128
        $region46: #{tpu_custom_call.1} parent=39 // pred_check_branch
          %307 = sbr.rel (%p305) target = $region48
        $region47: #{tpu_custom_call.1} parent=39 // pred_region
          %308 = dma.done %s301, 512
        $region48: #{tpu_custom_call.1} parent=39 // pred_fallthru
          _
        %p309 = scmp.lt.s32.totalorder %s29, 1
        %s310 = scalar_select %p309, %s29, 1
        %p311 = scmp.lt.s32.totalorder %s30, 0
        %s312 = scalar_select %p311, %s30, 0
        %s313 = smul.addr %s310, 4
        %s314 = sadd.s32 %s312, %s313
        %s315 = smul.addr %s314, 8
        %s316 = scalar_lea.vmem %s0, %s315
        %p317 = pneg %p60
        %p318 = pneg %p57
        %s319 = sand.u32 %s81, 1
        %s320 = scalar_lea.sflag [#allocation5], %s319
        %s321 = sand.u32 %s81, 1
        %s322 = smul.addr %s321, 32
        %s323 = scalar_lea.vmem [#allocation4], %s322
        %p324 = pneg %p94
        %p325 = pneg %p91
        %s326 = sand.u32 %s115, 1
        %s327 = scalar_lea.sflag [#allocation8], %s326
        %s328 = sand.u32 %s115, 1
        %s329 = smul.addr %s328, 32
        %s330 = scalar_lea.vmem [#allocation7], %s329
        %p331 = pneg %p128
        %p332 = pneg %p125
        %p333 = pneg %p149
        %p334 = pneg %p146
        %p335 = pneg %p170
        %p336 = pneg %p167
        %p337 = pneg %p198
        %p338 = pneg %p195
        %s339 = sand.u32 %s185, 1
        %s340 = scalar_lea.sflag [#allocation6], %s339
        %s341 = sand.u32 %s185, 1
        %s342 = smul.addr %s341, 96
        %s343 = scalar_lea.vmem [#allocation9], %s342
        %p344 = scmp.lt.s32.totalorder %s29, 1
        %s345 = scalar_select %p344, %s29, 1
        %p346 = scmp.lt.s32.totalorder %s30, 0
        %s347 = scalar_select %p346, %s30, 0
        %s348 = smul.addr %s345, 4
        %s349 = sadd.s32 %s347, %s348
        %s350 = smul.addr %s349, 8
        %s351 = scalar_lea.vmem %s0, %s350
        %s352 = ssub.s32 %s30, 1
        %p353 = scmp.gt.s32.totalorder %s352, 0
        %s354 = scalar_select %p353, %s352, 0
        %s355 = sadd.s32 %s30, 1
        %p356 = scmp.lt.s32.totalorder %s355, 0
        %s357 = scalar_select %p356, %s355, 0
        %v359 = vld [vmem:[%s351] sm:$0xff]
        %v360 = vld [vmem:[%s351 + $0x8] sm:$0xff]
        %v361 = vld [vmem:[%s351 + $0x10] sm:$0xff]
        %v362 = vld [vmem:[%s351 + $0x18] sm:$0xff]
        %v363 = vpack.c.bf16 %v360, %v359
        %v364 = vpack.c.bf16 %v362, %v361
        %365 = vst [vmem:[#allocation2 + $0x8] sm:$0xff] %v363
        %366 = vst [vmem:[#allocation2 + $0x20] sm:$0xff] %v364
        %v367 = vld [vmem:[%s295] sm:$0xff]
        %v368 = vld [vmem:[%s295 + $0x8] sm:$0xff]
        %v369 = vld [vmem:[%s295 + $0x10] sm:$0xff]
        %v370 = vld [vmem:[%s295 + $0x18] sm:$0xff]
        %v371 = vpack.c.bf16 %v368, %v367
        %v372 = vpack.c.bf16 %v370, %v369
        %p373 = scmp.eq.s32.totalorder %s30, 0
        %s374 = scalar_select %p373, 1, 0
        %v375 = vstv %s374
        %vm376 = vcmp.eq.s32.totalorder %v375, 1
        %v377 = vsel %vm376, 0, %v371
        %v378 = vsel %vm376, 0, %v372
        %vm379 = vcmask 1048544
        %380 = vst.msk [vmem:[#allocation2] sm:$0xff] %vm379, %v377
        %381 = vst.msk [vmem:[#allocation2 + $0x18] sm:$0xff] %vm379, %v378
        %v382 = vld [vmem:[%s304] sm:$0xff]
        %v383 = vld [vmem:[%s304 + $0x8] sm:$0xff]
        %v384 = vld [vmem:[%s304 + $0x10] sm:$0xff]
        %v385 = vld [vmem:[%s304 + $0x18] sm:$0xff]
        %v386 = vpack.c.bf16 %v383, %v382
        %v387 = vpack.c.bf16 %v385, %v384
        %v388 = vsel %vm376, 0, %v386
        %v389 = vsel %vm376, 0, %v387
        %vm390 = vcmask 31744
        %391 = vst.msk [vmem:[#allocation2 + $0x10] sm:$0xff] %vm390, %v388
        %392 = vst.msk [vmem:[#allocation2 + $0x28] sm:$0xff] %vm390, %v389
        %393 = vst [vmem:[#allocation3 + $0x10] sm:$0xff] %v363
        %394 = vst [vmem:[#allocation3 + $0x18] sm:$0xff] %v364
        %s395 = scalar_lea.vmem [#allocation3], 48
        %396 = vst [vmem:[%s395 + $0x10] sm:$0xff] %v363
        %397 = vst [vmem:[%s395 + $0x18] sm:$0xff] %v364
        %v398 = vld [vmem:[#allocation2] sm:$0xff]
        %v399 = vld [vmem:[#allocation2 + $0x8] sm:$0xff]
        %v400 = vld [vmem:[#allocation2 + $0x18] sm:$0xff]
        %v401 = vld [vmem:[#allocation2 + $0x20] sm:$0xff]
        %406 = vrot.lane.b32.xlu0 %v398, 1
        %v407 = vpop.permute.xlu0 %406
        %408 = vrot.lane.b32.xlu0 %v399, 1
        %v409 = vpop.permute.xlu0 %408
        %410 = vrot.lane.b32.xlu0 %v400, 1
        %v411 = vpop.permute.xlu0 %410
        %412 = vrot.lane.b32.xlu0 %v401, 1
        %v413 = vpop.permute.xlu0 %412
        %vm414 = vcmask 7168
        %v415 = vsel %vm414, %v407, %v409
        %v416 = vsel %vm414, %v411, %v413
        %419 = vst [vmem:[#allocation3] sm:$0xff] %v415
        %420 = vst [vmem:[#allocation3 + $0x8] sm:$0xff] %v416
        %v421 = vld [vmem:[#allocation2 + $0x8] sm:$0xff]
        %v422 = vld [vmem:[#allocation2 + $0x10] sm:$0xff]
        %v423 = vld [vmem:[#allocation2 + $0x20] sm:$0xff]
        %v424 = vld [vmem:[#allocation2 + $0x28] sm:$0xff]
        %429 = vrot.lane.b32.xlu0 %v421, 127
        %v430 = vpop.permute.xlu0 %429
        %431 = vrot.lane.b32.xlu0 %v422, 127
        %v432 = vpop.permute.xlu0 %431
        %433 = vrot.lane.b32.xlu0 %v423, 127
        %v434 = vpop.permute.xlu0 %433
        %435 = vrot.lane.b32.xlu0 %v424, 127
        %v436 = vpop.permute.xlu0 %435
        %vm437 = vcmask 1039360
        %v438 = vsel %vm437, %v430, %v432
        %v439 = vsel %vm437, %v434, %v436
        %442 = vst [vmem:[#allocation3 + $0x20] sm:$0xff] %v438
        %443 = vst [vmem:[#allocation3 + $0x28] sm:$0xff] %v439
        %v444 = vld [vmem:[%s3] sm:$0xf]
        %v445 = vld [vmem:[%s3 + $0x4] sm:$0xf]
        %v446 = vld [vmem:[%s3 + $0x8] sm:$0xf]
        %v447 = vld [vmem:[%s3 + $0xc] sm:$0xf]
        %v448 = vld [vmem:[%s3 + $0x10] sm:$0xf]
        %v449 = vld [vmem:[%s3 + $0x14] sm:$0xf]
        %v450 = vld [vmem:[%s3 + $0x18] sm:$0xf]
        %v451 = vld [vmem:[%s3 + $0x1c] sm:$0xf]
        %v452 = vld [vmem:[#allocation3] sm:$0xff]
        %v453 = vld [vmem:[#allocation3 + $0x8] sm:$0xff]
        %v454 = vld [vmem:[#allocation3 + $0x10] sm:$0xff]
        %v455 = vld [vmem:[#allocation3 + $0x18] sm:$0xff]
        %v456 = vld [vmem:[#allocation3 + $0x20] sm:$0xff]
        %v457 = vld [vmem:[#allocation3 + $0x28] sm:$0xff]
        %v458 = vld [vmem:[%s4] sm:$0xff]
        %v459 = vld [vmem:[%s4 + $0x8] sm:$0xff]
        %v460 = vld [vmem:[%s4 + $0x10] sm:$0xff]
        %v461 = vld [vmem:[%s4 + $0x18] sm:$0xff]
        %v462 = vld [vmem:[%s4 + $0x20] sm:$0xff]
        %v463 = vld [vmem:[%s4 + $0x28] sm:$0xff]
        %v464 = vld [vmem:[%s4 + $0x30] sm:$0xff]
        %v465 = vld [vmem:[%s4 + $0x38] sm:$0xff]
        %467 = vset.pattern.permute.xlu0 0
        %468 = vperm.xlu0 %467, %v458
        %v469 = vpop.permute.xlu0 %468
        %472 = vset.pattern.permute.xlu0 0
        %473 = vperm.xlu0 %472, %v459
        %v474 = vpop.permute.xlu0 %473
        %477 = vset.pattern.permute.xlu0 0
        %478 = vperm.xlu0 %477, %v460
        %v479 = vpop.permute.xlu0 %478
        %482 = vset.pattern.permute.xlu0 0
        %483 = vperm.xlu0 %482, %v461
        %v484 = vpop.permute.xlu0 %483
        %487 = vset.pattern.permute.xlu0 0
        %488 = vperm.xlu0 %487, %v462
        %v489 = vpop.permute.xlu0 %488
        %492 = vset.pattern.permute.xlu0 0
        %493 = vperm.xlu0 %492, %v463
        %v494 = vpop.permute.xlu0 %493
        %497 = vset.pattern.permute.xlu0 0
        %498 = vperm.xlu0 %497, %v464
        %v499 = vpop.permute.xlu0 %498
        %502 = vset.pattern.permute.xlu0 0
        %503 = vperm.xlu0 %502, %v465
        %v504 = vpop.permute.xlu0 %503
        %v514 = vunpack.c.l.b16 %v444
        %v515 = vunpack.c.l.b16 %v445
        %v516 = vunpack.c.l.b16 %v446
        %v517 = vunpack.c.l.b16 %v447
        %v518 = vunpack.c.l.b16 %v448
        %v519 = vunpack.c.l.b16 %v449
        %v520 = vunpack.c.l.b16 %v450
        %v521 = vunpack.c.l.b16 %v451
        %v522 = vpack.c.b16 %v515, %v514
        %v523 = vpack.c.b16 %v517, %v516
        %v524 = vpack.c.b16 %v519, %v518
        %v525 = vpack.c.b16 %v521, %v520
        %vm526 = vcmask 785408
        %v528 = vsel %vm526, %v522, 0
        %v531 = vsel %vm526, %v523, 0
        %v534 = vsel %vm526, %v524, 0
        %v537 = vsel %vm526, %v525, 0
        %539 = vmatprep.subr.bf16.mxu0 0
        %540 = vmatpush1.bf16.msra.mxu0 %v452
        %541 = vmatprep.subr.bf16.mxu0 0
        %542 = vmatpush1.bf16.msra.mxu0 %v453
        %543 = vmatprep.subr.bf16.mxu0 0
        %544 = vmatpush1.bf16.msra.mxu0 %v454
        %545 = vmatprep.subr.bf16.mxu0 0
        %546 = vmatpush1.bf16.msra.mxu0 %v455
        %547 = vmatprep.subr.bf16.mxu0 0
        %548 = vmatpush1.bf16.msra.mxu0 %v456
        %549 = vmatprep.subr.bf16.mxu0 0
        %550 = vmatpush1.bf16.msra.mxu0 %v457
        %551 = vmatprep.subr.bf16.mxu0 0
        %552 = vmatpush1.bf16.msra.mxu0 0
        %553 = vmatprep.subr.bf16.mxu0 0
        %554 = vmatpush1.bf16.msra.mxu0 0
        %555 = vmatprep.subr.bf16.mxu0 0
        %556 = vmatpush1.bf16.msra.mxu0 0
        %557 = vmatprep.subr.bf16.mxu0 0
        %558 = vmatpush1.bf16.msra.mxu0 0
        %559 = vmatprep.subr.bf16.mxu0 0
        %560 = vmatpush1.bf16.msra.mxu0 0
        %561 = vmatprep.subr.bf16.mxu0 0
        %562 = vmatpush1.bf16.msra.mxu0 0
        %563 = vmatprep.subr.bf16.mxu0 0
        %564 = vmatpush1.bf16.msra.mxu0 0
        %565 = vmatprep.subr.bf16.mxu0 0
        %566 = vmatpush1.bf16.msra.mxu0 0
        %567 = vmatprep.subr.bf16.mxu0 0
        %568 = vmatpush1.bf16.msra.mxu0 0
        %569 = vmatprep.subr.bf16.mxu0 0
        %570 = vmatpush1.bf16.msra.mxu0 0
        %571 = vmatprep.mubr.bf16.mxu0 0
        %572 = vmatmul.mubr.bf16.gmra.mrb[0].mxu0 %v528
        %v573 = vpop.f32.mrb[0].mxu0
        %v574 = vadd.f32 %v469, %v573
        %v575 = vpop.f32.mrb[0].mxu0
        %v576 = vpop.f32.mrb[0].mxu0
        %v577 = vadd.f32 %v474, %v576
        %v578 = vpop.f32.mrb[0].mxu0
        %579 = vmatprep.mubr.bf16.mxu0 0
        %580 = vmatmul.mubr.bf16.gmra.mrb[0].mxu0 %v531
        %v581 = vpop.f32.mrb[0].mxu0
        %v582 = vadd.f32 %v479, %v581
        %v583 = vpop.f32.mrb[0].mxu0
        %v584 = vpop.f32.mrb[0].mxu0
        %v585 = vadd.f32 %v484, %v584
        %v586 = vpop.f32.mrb[0].mxu0
        %587 = vmatprep.mubr.bf16.mxu0 0
        %588 = vmatmul.mubr.bf16.gmra.mrb[0].mxu0 %v534
        %v589 = vpop.f32.mrb[0].mxu0
        %v590 = vadd.f32 %v489, %v589
        %v591 = vpop.f32.mrb[0].mxu0
        %v592 = vpop.f32.mrb[0].mxu0
        %v593 = vadd.f32 %v494, %v592
        %v594 = vpop.f32.mrb[0].mxu0
        %595 = vmatprep.mubr.bf16.mxu0 0
        %596 = vmatmul.mubr.bf16.gmra.mrb[0].mxu0 %v537
        %v597 = vpop.f32.mrb[0].mxu0
        %v598 = vadd.f32 %v499, %v597
        %v599 = vpop.f32.mrb[0].mxu0
        %v600 = vpop.f32.mrb[0].mxu0
        %v601 = vadd.f32 %v504, %v600
        %v602 = vpop.f32.mrb[0].mxu0
        %603 = vdwg.mxu0
        %v604 = vpack.c.bf16 %v577, %v574
        %v605 = vpack.c.bf16 %v585, %v582
        %v606 = vpack.c.bf16 %v593, %v590
        %v607 = vpack.c.bf16 %v601, %v598
        %v612 = vunpack.c.l.b16 %v604
        %v613 = vunpack.c.h.b16 %v604
        %v614 = vunpack.c.l.b16 %v605
        %v615 = vunpack.c.h.b16 %v605
        %v616 = vunpack.c.l.b16 %v606
        %v617 = vunpack.c.h.b16 %v606
        %v618 = vunpack.c.l.b16 %v607
        %v619 = vunpack.c.h.b16 %v607
        %v620 = vpack.c.b16 %v612, %v612
        %v621 = vpack.c.b16 %v613, %v613
        %v622 = vpack.c.b16 %v614, %v614
        %v623 = vpack.c.b16 %v615, %v615
        %v624 = vpack.c.b16 %v616, %v616
        %v625 = vpack.c.b16 %v617, %v617
        %v626 = vpack.c.b16 %v618, %v618
        %v627 = vpack.c.b16 %v619, %v619
        %636 = vst [vmem:[%s343] sm:$0xf] %v620
        %637 = vst [vmem:[%s343 + $0x4] sm:$0xf] %v621
        %638 = vst [vmem:[%s343 + $0x8] sm:$0xf] %v622
        %639 = vst [vmem:[%s343 + $0xc] sm:$0xf] %v623
        %640 = vst [vmem:[%s343 + $0x10] sm:$0xf] %v624
        %641 = vst [vmem:[%s343 + $0x14] sm:$0xf] %v625
        %642 = vst [vmem:[%s343 + $0x18] sm:$0xf] %v626
        %643 = vst [vmem:[%s343 + $0x1c] sm:$0xf] %v627
        %v644 = vld [vmem:[#allocation2] sm:$0xff]
        %v645 = vld [vmem:[#allocation2 + $0x8] sm:$0xff]
        %v646 = vld [vmem:[#allocation2 + $0x18] sm:$0xff]
        %v647 = vld [vmem:[#allocation2 + $0x20] sm:$0xff]
        %652 = vrot.lane.b32.xlu0 %v644, 2
        %v653 = vpop.permute.xlu0 %652
        %654 = vrot.lane.b32.xlu0 %v645, 2
        %v655 = vpop.permute.xlu0 %654
        %656 = vrot.lane.b32.xlu0 %v646, 2
        %v657 = vpop.permute.xlu0 %656
        %658 = vrot.lane.b32.xlu0 %v647, 2
        %v659 = vpop.permute.xlu0 %658
        %vm660 = vcmask 15360
        %v661 = vsel %vm660, %v653, %v655
        %v662 = vsel %vm660, %v657, %v659
        %665 = vst [vmem:[%s395] sm:$0xff] %v661
        %666 = vst [vmem:[%s395 + $0x8] sm:$0xff] %v662
        %v667 = vld [vmem:[#allocation2 + $0x8] sm:$0xff]
        %v668 = vld [vmem:[#allocation2 + $0x10] sm:$0xff]
        %v669 = vld [vmem:[#allocation2 + $0x20] sm:$0xff]
        %v670 = vld [vmem:[#allocation2 + $0x28] sm:$0xff]
        %675 = vrot.lane.b32.xlu0 %v667, 126
        %v676 = vpop.permute.xlu0 %675
        %677 = vrot.lane.b32.xlu0 %v668, 126
        %v678 = vpop.permute.xlu0 %677
        %679 = vrot.lane.b32.xlu0 %v669, 126
        %v680 = vpop.permute.xlu0 %679
        %681 = vrot.lane.b32.xlu0 %v670, 126
        %v682 = vpop.permute.xlu0 %681
        %vm683 = vcmask 1031168
        %v684 = vsel %vm683, %v676, %v678
        %v685 = vsel %vm683, %v680, %v682
        %688 = vst [vmem:[%s395 + $0x20] sm:$0xff] %v684
        %689 = vst [vmem:[%s395 + $0x28] sm:$0xff] %v685
        %s690 = scalar_lea.vmem %s3, 32
        %v691 = vld [vmem:[%s690] sm:$0xf]
        %v692 = vld [vmem:[%s690 + $0x4] sm:$0xf]
        %v693 = vld [vmem:[%s690 + $0x8] sm:$0xf]
        %v694 = vld [vmem:[%s690 + $0xc] sm:$0xf]
        %v695 = vld [vmem:[%s690 + $0x10] sm:$0xf]
        %v696 = vld [vmem:[%s690 + $0x14] sm:$0xf]
        %v697 = vld [vmem:[%s690 + $0x18] sm:$0xf]
        %v698 = vld [vmem:[%s690 + $0x1c] sm:$0xf]
        %v699 = vld [vmem:[%s395] sm:$0xff]
        %v700 = vld [vmem:[%s395 + $0x8] sm:$0xff]
        %v701 = vld [vmem:[%s395 + $0x10] sm:$0xff]
        %v702 = vld [vmem:[%s395 + $0x18] sm:$0xff]
        %v703 = vld [vmem:[%s395 + $0x20] sm:$0xff]
        %v704 = vld [vmem:[%s395 + $0x28] sm:$0xff]
        %s705 = scalar_lea.vmem %s4, 64
        %v706 = vld [vmem:[%s705] sm:$0xff]
        %v707 = vld [vmem:[%s705 + $0x8] sm:$0xff]
        %v708 = vld [vmem:[%s705 + $0x10] sm:$0xff]
        %v709 = vld [vmem:[%s705 + $0x18] sm:$0xff]
        %v710 = vld [vmem:[%s705 + $0x20] sm:$0xff]
        %v711 = vld [vmem:[%s705 + $0x28] sm:$0xff]
        %v712 = vld [vmem:[%s705 + $0x30] sm:$0xff]
        %v713 = vld [vmem:[%s705 + $0x38] sm:$0xff]
        %715 = vset.pattern.permute.xlu0 0
        %716 = vperm.xlu0 %715, %v706
        %v717 = vpop.permute.xlu0 %716
        %720 = vset.pattern.permute.xlu0 0
        %721 = vperm.xlu0 %720, %v707
        %v722 = vpop.permute.xlu0 %721
        %725 = vset.pattern.permute.xlu0 0
        %726 = vperm.xlu0 %725, %v708
        %v727 = vpop.permute.xlu0 %726
        %730 = vset.pattern.permute.xlu0 0
        %731 = vperm.xlu0 %730, %v709
        %v732 = vpop.permute.xlu0 %731
        %735 = vset.pattern.permute.xlu0 0
        %736 = vperm.xlu0 %735, %v710
        %v737 = vpop.permute.xlu0 %736
        %740 = vset.pattern.permute.xlu0 0
        %741 = vperm.xlu0 %740, %v711
        %v742 = vpop.permute.xlu0 %741
        %745 = vset.pattern.permute.xlu0 0
        %746 = vperm.xlu0 %745, %v712
        %v747 = vpop.permute.xlu0 %746
        %750 = vset.pattern.permute.xlu0 0
        %751 = vperm.xlu0 %750, %v713
        %v752 = vpop.permute.xlu0 %751
        %v762 = vunpack.c.l.b16 %v691
        %v763 = vunpack.c.l.b16 %v692
        %v764 = vunpack.c.l.b16 %v693
        %v765 = vunpack.c.l.b16 %v694
        %v766 = vunpack.c.l.b16 %v695
        %v767 = vunpack.c.l.b16 %v696
        %v768 = vunpack.c.l.b16 %v697
        %v769 = vunpack.c.l.b16 %v698
        %v770 = vpack.c.b16 %v763, %v762
        %v771 = vpack.c.b16 %v765, %v764
        %v772 = vpack.c.b16 %v767, %v766
        %v773 = vpack.c.b16 %v769, %v768
        %v775 = vsel %vm526, %v770, 0
        %v778 = vsel %vm526, %v771, 0
        %v781 = vsel %vm526, %v772, 0
        %v784 = vsel %vm526, %v773, 0
        %786 = vmatprep.subr.bf16.mxu0 0
        %787 = vmatpush1.bf16.msra.mxu0 %v699
        %788 = vmatprep.subr.bf16.mxu0 0
        %789 = vmatpush1.bf16.msra.mxu0 %v700
        %790 = vmatprep.subr.bf16.mxu0 0
        %791 = vmatpush1.bf16.msra.mxu0 %v701
        %792 = vmatprep.subr.bf16.mxu0 0
        %793 = vmatpush1.bf16.msra.mxu0 %v702
        %794 = vmatprep.subr.bf16.mxu0 0
        %795 = vmatpush1.bf16.msra.mxu0 %v703
        %796 = vmatprep.subr.bf16.mxu0 0
        %797 = vmatpush1.bf16.msra.mxu0 %v704
        %798 = vmatprep.subr.bf16.mxu0 0
        %799 = vmatpush1.bf16.msra.mxu0 0
        %800 = vmatprep.subr.bf16.mxu0 0
        %801 = vmatpush1.bf16.msra.mxu0 0
        %802 = vmatprep.subr.bf16.mxu0 0
        %803 = vmatpush1.bf16.msra.mxu0 0
        %804 = vmatprep.subr.bf16.mxu0 0
        %805 = vmatpush1.bf16.msra.mxu0 0
        %806 = vmatprep.subr.bf16.mxu0 0
        %807 = vmatpush1.bf16.msra.mxu0 0
        %808 = vmatprep.subr.bf16.mxu0 0
        %809 = vmatpush1.bf16.msra.mxu0 0
        %810 = vmatprep.subr.bf16.mxu0 0
        %811 = vmatpush1.bf16.msra.mxu0 0
        %812 = vmatprep.subr.bf16.mxu0 0
        %813 = vmatpush1.bf16.msra.mxu0 0
        %814 = vmatprep.subr.bf16.mxu0 0
        %815 = vmatpush1.bf16.msra.mxu0 0
        %816 = vmatprep.subr.bf16.mxu0 0
        %817 = vmatpush1.bf16.msra.mxu0 0
        %818 = vmatprep.mubr.bf16.mxu0 0
        %819 = vmatmul.mubr.bf16.gmra.mrb[0].mxu0 %v775
        %v820 = vpop.f32.mrb[0].mxu0
        %v821 = vadd.f32 %v717, %v820
        %v822 = vpop.f32.mrb[0].mxu0
        %v823 = vpop.f32.mrb[0].mxu0
        %v824 = vadd.f32 %v722, %v823
        %v825 = vpop.f32.mrb[0].mxu0
        %826 = vmatprep.mubr.bf16.mxu0 0
        %827 = vmatmul.mubr.bf16.gmra.mrb[0].mxu0 %v778
        %v828 = vpop.f32.mrb[0].mxu0
        %v829 = vadd.f32 %v727, %v828
        %v830 = vpop.f32.mrb[0].mxu0
        %v831 = vpop.f32.mrb[0].mxu0
        %v832 = vadd.f32 %v732, %v831
        %v833 = vpop.f32.mrb[0].mxu0
        %834 = vmatprep.mubr.bf16.mxu0 0
        %835 = vmatmul.mubr.bf16.gmra.mrb[0].mxu0 %v781
        %v836 = vpop.f32.mrb[0].mxu0
        %v837 = vadd.f32 %v737, %v836
        %v838 = vpop.f32.mrb[0].mxu0
        %v839 = vpop.f32.mrb[0].mxu0
        %v840 = vadd.f32 %v742, %v839
        %v841 = vpop.f32.mrb[0].mxu0
        %842 = vmatprep.mubr.bf16.mxu0 0
        %843 = vmatmul.mubr.bf16.gmra.mrb[0].mxu0 %v784
        %v844 = vpop.f32.mrb[0].mxu0
        %v845 = vadd.f32 %v747, %v844
        %v846 = vpop.f32.mrb[0].mxu0
        %v847 = vpop.f32.mrb[0].mxu0
        %v848 = vadd.f32 %v752, %v847
        %v849 = vpop.f32.mrb[0].mxu0
        %850 = vdwg.mxu0
        %v851 = vpack.c.bf16 %v824, %v821
        %v852 = vpack.c.bf16 %v832, %v829
        %v853 = vpack.c.bf16 %v840, %v837
        %v854 = vpack.c.bf16 %v848, %v845
        %v859 = vunpack.c.l.b16 %v851
        %v860 = vunpack.c.h.b16 %v851
        %v861 = vunpack.c.l.b16 %v852
        %v862 = vunpack.c.h.b16 %v852
        %v863 = vunpack.c.l.b16 %v853
        %v864 = vunpack.c.h.b16 %v853
        %v865 = vunpack.c.l.b16 %v854
        %v866 = vunpack.c.h.b16 %v854
        %v867 = vpack.c.b16 %v859, %v859
        %v868 = vpack.c.b16 %v860, %v860
        %v869 = vpack.c.b16 %v861, %v861
        %v870 = vpack.c.b16 %v862, %v862
        %v871 = vpack.c.b16 %v863, %v863
        %v872 = vpack.c.b16 %v864, %v864
        %v873 = vpack.c.b16 %v865, %v865
        %v874 = vpack.c.b16 %v866, %v866
        %s883 = scalar_lea.vmem %s343, 32 [#allocation9]
        %884 = vst [vmem:[%s883] sm:$0xf] %v867
        %885 = vst [vmem:[%s883 + $0x4] sm:$0xf] %v868
        %886 = vst [vmem:[%s883 + $0x8] sm:$0xf] %v869
        %887 = vst [vmem:[%s883 + $0xc] sm:$0xf] %v870
        %888 = vst [vmem:[%s883 + $0x10] sm:$0xf] %v871
        %889 = vst [vmem:[%s883 + $0x14] sm:$0xf] %v872
        %890 = vst [vmem:[%s883 + $0x18] sm:$0xf] %v873
        %891 = vst [vmem:[%s883 + $0x1c] sm:$0xf] %v874
        %v892 = vld [vmem:[#allocation2] sm:$0xff]
        %v893 = vld [vmem:[#allocation2 + $0x8] sm:$0xff]
        %v894 = vld [vmem:[#allocation2 + $0x18] sm:$0xff]
        %v895 = vld [vmem:[#allocation2 + $0x20] sm:$0xff]
        %900 = vrot.lane.b32.xlu0 %v892, 4
        %v901 = vpop.permute.xlu0 %900
        %902 = vrot.lane.b32.xlu0 %v893, 4
        %v903 = vpop.permute.xlu0 %902
        %904 = vrot.lane.b32.xlu0 %v894, 4
        %v905 = vpop.permute.xlu0 %904
        %906 = vrot.lane.b32.xlu0 %v895, 4
        %v907 = vpop.permute.xlu0 %906
        %vm908 = vcmask 31744
        %v909 = vsel %vm908, %v901, %v903
        %v910 = vsel %vm908, %v905, %v907
        %913 = vst [vmem:[#allocation3] sm:$0xff] %v909
        %914 = vst [vmem:[#allocation3 + $0x8] sm:$0xff] %v910
        %v915 = vld [vmem:[#allocation2 + $0x8] sm:$0xff]
        %v916 = vld [vmem:[#allocation2 + $0x10] sm:$0xff]
        %v917 = vld [vmem:[#allocation2 + $0x20] sm:$0xff]
        %v918 = vld [vmem:[#allocation2 + $0x28] sm:$0xff]
        %923 = vrot.lane.b32.xlu0 %v915, 124
        %v924 = vpop.permute.xlu0 %923
        %925 = vrot.lane.b32.xlu0 %v916, 124
        %v926 = vpop.permute.xlu0 %925
        %927 = vrot.lane.b32.xlu0 %v917, 124
        %v928 = vpop.permute.xlu0 %927
        %929 = vrot.lane.b32.xlu0 %v918, 124
        %v930 = vpop.permute.xlu0 %929
        %vm931 = vcmask 1014784
        %v932 = vsel %vm931, %v924, %v926
        %v933 = vsel %vm931, %v928, %v930
        %936 = vst [vmem:[#allocation3 + $0x20] sm:$0xff] %v932
        %937 = vst [vmem:[#allocation3 + $0x28] sm:$0xff] %v933
        %s938 = scalar_lea.vmem %s3, 64
        %v939 = vld [vmem:[%s938] sm:$0xf]
        %v940 = vld [vmem:[%s938 + $0x4] sm:$0xf]
        %v941 = vld [vmem:[%s938 + $0x8] sm:$0xf]
        %v942 = vld [vmem:[%s938 + $0xc] sm:$0xf]
        %v943 = vld [vmem:[%s938 + $0x10] sm:$0xf]
        %v944 = vld [vmem:[%s938 + $0x14] sm:$0xf]
        %v945 = vld [vmem:[%s938 + $0x18] sm:$0xf]
        %v946 = vld [vmem:[%s938 + $0x1c] sm:$0xf]
        %v947 = vld [vmem:[#allocation3] sm:$0xff]
        %v948 = vld [vmem:[#allocation3 + $0x8] sm:$0xff]
        %v949 = vld [vmem:[#allocation3 + $0x10] sm:$0xff]
        %v950 = vld [vmem:[#allocation3 + $0x18] sm:$0xff]
        %v951 = vld [vmem:[#allocation3 + $0x20] sm:$0xff]
        %v952 = vld [vmem:[#allocation3 + $0x28] sm:$0xff]
        %s953 = scalar_lea.vmem %s4, 128
        %v954 = vld [vmem:[%s953] sm:$0xff]
        %v955 = vld [vmem:[%s953 + $0x8] sm:$0xff]
        %v956 = vld [vmem:[%s953 + $0x10] sm:$0xff]
        %v957 = vld [vmem:[%s953 + $0x18] sm:$0xff]
        %v958 = vld [vmem:[%s953 + $0x20] sm:$0xff]
        %v959 = vld [vmem:[%s953 + $0x28] sm:$0xff]
        %v960 = vld [vmem:[%s953 + $0x30] sm:$0xff]
        %v961 = vld [vmem:[%s953 + $0x38] sm:$0xff]
        %963 = vset.pattern.permute.xlu0 0
        %964 = vperm.xlu0 %963, %v954
        %v965 = vpop.permute.xlu0 %964
        %968 = vset.pattern.permute.xlu0 0
        %969 = vperm.xlu0 %968, %v955
        %v970 = vpop.permute.xlu0 %969
        %973 = vset.pattern.permute.xlu0 0
        %974 = vperm.xlu0 %973, %v956
        %v975 = vpop.permute.xlu0 %974
        %978 = vset.pattern.permute.xlu0 0
        %979 = vperm.xlu0 %978, %v957
        %v980 = vpop.permute.xlu0 %979
        %983 = vset.pattern.permute.xlu0 0
        %984 = vperm.xlu0 %983, %v958
        %v985 = vpop.permute.xlu0 %984
        %988 = vset.pattern.permute.xlu0 0
        %989 = vperm.xlu0 %988, %v959
        %v990 = vpop.permute.xlu0 %989
        %993 = vset.pattern.permute.xlu0 0
        %994 = vperm.xlu0 %993, %v960
        %v995 = vpop.permute.xlu0 %994
        %998 = vset.pattern.permute.xlu0 0
        %999 = vperm.xlu0 %998, %v961
        %v1000 = vpop.permute.xlu0 %999
        %v1010 = vunpack.c.l.b16 %v939
        %v1011 = vunpack.c.l.b16 %v940
        %v1012 = vunpack.c.l.b16 %v941
        %v1013 = vunpack.c.l.b16 %v942
        %v1014 = vunpack.c.l.b16 %v943
        %v1015 = vunpack.c.l.b16 %v944
        %v1016 = vunpack.c.l.b16 %v945
        %v1017 = vunpack.c.l.b16 %v946
        %v1018 = vpack.c.b16 %v1011, %v1010
        %v1019 = vpack.c.b16 %v1013, %v1012
        %v1020 = vpack.c.b16 %v1015, %v1014
        %v1021 = vpack.c.b16 %v1017, %v1016
        %v1023 = vsel %vm526, %v1018, 0
        %v1026 = vsel %vm526, %v1019, 0
        %v1029 = vsel %vm526, %v1020, 0
        %v1032 = vsel %vm526, %v1021, 0
        %1034 = vmatprep.subr.bf16.mxu0 0
        %1035 = vmatpush1.bf16.msra.mxu0 %v947
        %1036 = vmatprep.subr.bf16.mxu0 0
        %1037 = vmatpush1.bf16.msra.mxu0 %v948
        %1038 = vmatprep.subr.bf16.mxu0 0
        %1039 = vmatpush1.bf16.msra.mxu0 %v949
        %1040 = vmatprep.subr.bf16.mxu0 0
        %1041 = vmatpush1.bf16.msra.mxu0 %v950
        %1042 = vmatprep.subr.bf16.mxu0 0
        %1043 = vmatpush1.bf16.msra.mxu0 %v951
        %1044 = vmatprep.subr.bf16.mxu0 0
        %1045 = vmatpush1.bf16.msra.mxu0 %v952
        %1046 = vmatprep.subr.bf16.mxu0 0
        %1047 = vmatpush1.bf16.msra.mxu0 0
        %1048 = vmatprep.subr.bf16.mxu0 0
        %1049 = vmatpush1.bf16.msra.mxu0 0
        %1050 = vmatprep.subr.bf16.mxu0 0
        %1051 = vmatpush1.bf16.msra.mxu0 0
        %1052 = vmatprep.subr.bf16.mxu0 0
        %1053 = vmatpush1.bf16.msra.mxu0 0
        %1054 = vmatprep.subr.bf16.mxu0 0
        %1055 = vmatpush1.bf16.msra.mxu0 0
        %1056 = vmatprep.subr.bf16.mxu0 0
        %1057 = vmatpush1.bf16.msra.mxu0 0
        %1058 = vmatprep.subr.bf16.mxu0 0
        %1059 = vmatpush1.bf16.msra.mxu0 0
        %1060 = vmatprep.subr.bf16.mxu0 0
        %1061 = vmatpush1.bf16.msra.mxu0 0
        %1062 = vmatprep.subr.bf16.mxu0 0
        %1063 = vmatpush1.bf16.msra.mxu0 0
        %1064 = vmatprep.subr.bf16.mxu0 0
        %1065 = vmatpush1.bf16.msra.mxu0 0
        %1066 = vmatprep.mubr.bf16.mxu0 0
        %1067 = vmatmul.mubr.bf16.gmra.mrb[0].mxu0 %v1023
        %v1068 = vpop.f32.mrb[0].mxu0
        %v1069 = vadd.f32 %v965, %v1068
        %v1070 = vpop.f32.mrb[0].mxu0
        %v1071 = vpop.f32.mrb[0].mxu0
        %v1072 = vadd.f32 %v970, %v1071
        %v1073 = vpop.f32.mrb[0].mxu0
        %1074 = vmatprep.mubr.bf16.mxu0 0
        %1075 = vmatmul.mubr.bf16.gmra.mrb[0].mxu0 %v1026
        %v1076 = vpop.f32.mrb[0].mxu0
        %v1077 = vadd.f32 %v975, %v1076
        %v1078 = vpop.f32.mrb[0].mxu0
        %v1079 = vpop.f32.mrb[0].mxu0
        %v1080 = vadd.f32 %v980, %v1079
        %v1081 = vpop.f32.mrb[0].mxu0
        %1082 = vmatprep.mubr.bf16.mxu0 0
        %1083 = vmatmul.mubr.bf16.gmra.mrb[0].mxu0 %v1029
        %v1084 = vpop.f32.mrb[0].mxu0
        %v1085 = vadd.f32 %v985, %v1084
        %v1086 = vpop.f32.mrb[0].mxu0
        %v1087 = vpop.f32.mrb[0].mxu0
        %v1088 = vadd.f32 %v990, %v1087
        %v1089 = vpop.f32.mrb[0].mxu0
        %1090 = vmatprep.mubr.bf16.mxu0 0
        %1091 = vmatmul.mubr.bf16.gmra.mrb[0].mxu0 %v1032
        %v1092 = vpop.f32.mrb[0].mxu0
        %v1093 = vadd.f32 %v995, %v1092
        %v1094 = vpop.f32.mrb[0].mxu0
        %v1095 = vpop.f32.mrb[0].mxu0
        %v1096 = vadd.f32 %v1000, %v1095
        %v1097 = vpop.f32.mrb[0].mxu0
        %1098 = vdwg.mxu0
        %v1099 = vpack.c.bf16 %v1072, %v1069
        %v1100 = vpack.c.bf16 %v1080, %v1077
        %v1101 = vpack.c.bf16 %v1088, %v1085
        %v1102 = vpack.c.bf16 %v1096, %v1093
        %v1107 = vunpack.c.l.b16 %v1099
        %v1108 = vunpack.c.h.b16 %v1099
        %v1109 = vunpack.c.l.b16 %v1100
        %v1110 = vunpack.c.h.b16 %v1100
        %v1111 = vunpack.c.l.b16 %v1101
        %v1112 = vunpack.c.h.b16 %v1101
        %v1113 = vunpack.c.l.b16 %v1102
        %v1114 = vunpack.c.h.b16 %v1102
        %v1115 = vpack.c.b16 %v1107, %v1107
        %v1116 = vpack.c.b16 %v1108, %v1108
        %v1117 = vpack.c.b16 %v1109, %v1109
        %v1118 = vpack.c.b16 %v1110, %v1110
        %v1119 = vpack.c.b16 %v1111, %v1111
        %v1120 = vpack.c.b16 %v1112, %v1112
        %v1121 = vpack.c.b16 %v1113, %v1113
        %v1122 = vpack.c.b16 %v1114, %v1114
        %s1131 = scalar_lea.vmem %s343, 64 [#allocation9]
        %1132 = vst [vmem:[%s1131] sm:$0xf] %v1115
        %1133 = vst [vmem:[%s1131 + $0x4] sm:$0xf] %v1116
        %1134 = vst [vmem:[%s1131 + $0x8] sm:$0xf] %v1117
        %1135 = vst [vmem:[%s1131 + $0xc] sm:$0xf] %v1118
        %1136 = vst [vmem:[%s1131 + $0x10] sm:$0xf] %v1119
        %1137 = vst [vmem:[%s1131 + $0x14] sm:$0xf] %v1120
        %1138 = vst [vmem:[%s1131 + $0x18] sm:$0xf] %v1121
        %1139 = vst [vmem:[%s1131 + $0x1c] sm:$0xf] %v1122
        %s1140 = sand.u32 %s185, 1
        %s1141 = scalar_lea.sflag [#allocation6], %s1140
        %s1142 = sand.u32 %s185, 1
        %s1143 = smul.addr %s1142, 96
        %s1144 = scalar_lea.vmem [#allocation9], %s1143
        // Predicated region
        $region49: #{tpu_custom_call.1} parent=39 // pred_check
          %p1145 = pneg %p195
        $region50: #{tpu_custom_call.1} parent=39 // pred_check_branch
          %1147 = sbr.rel (%p1145) target = $region52
        $region51: #{tpu_custom_call.1} parent=39 // pred_region
          #allocation11 [shape = 'u32[6]{0}', space=smem, size = 0x18, scoped, tag = 'DMA stride descriptor']
          %s1149 = ssub.s32 1536, 1536
          %1150 = vsyncadd %s1141, %s1149
          %s1151 = smul.addr %s29, 8
          %s1152 = sadd.s32 %s30, %s1151
          %s1153 = smul.addr %s1152, 64
          %s1154 = scalar_lea.hbm %s5, %s1153
          %s1156 = sshll.u32 1, 14
          %s1157 = sxor.u32 4294967295, %s1156
          %s1160 = sshll.u32 7, 18
          %s1161 = sxor.u32 4294967295, %s1160
          %s1162 = sand.u32 0, %s1161
          %s1164 = sor.u32 %s1162, 0
          %s1166 = sshll.u32 3, 24
          %s1167 = sxor.u32 4294967295, %s1166
          %s1168 = sand.u32 %s1164, %s1167
          %s1170 = sor.u32 %s1168, 0
          %s1171 = sshll.u32 %s1144, 4
          %s1172 = int_to_ptr.vmem [resolvable:$true] %s1171
          %1178 = sst [smem:[#allocation11]] 512
          %s1179 = scalar_lea.smem [#allocation11], 1
          %1180 = sst [smem:[%s1179]] 1024
          %s1181 = scalar_lea.smem [#allocation11], 2
          %1182 = sst [smem:[%s1181]] 8
          %s1183 = scalar_lea.smem [#allocation11], 3
          %1184 = sst [smem:[%s1183]] 64
          %s1185 = scalar_lea.smem [#allocation11], 4
          %1186 = sst [smem:[%s1185]] 64
          %s1187 = scalar_lea.smem [#allocation11], 5
          %1188 = sst [smem:[%s1187]] 4
          %1190 = dma.general %s1172, 1536, %s1154, %s1141, [#allocation10], [#allocation11], %s1170, 0
        $region52: #{tpu_custom_call.1} parent=39 // pred_fallthru
          _
      $region40: #{tpu_custom_call.1} parent=5 // pred_fallthru
        _
      %p1191 = scmp.le.s32.totalorder 2, %s20
      // Predicated region
      $region53: #{tpu_custom_call.1} parent=5 // pred_check
        %p1192 = pneg %p1191
      $region54: #{tpu_custom_call.1} parent=5 // pred_check_branch
        %1194 = sbr.rel (%p1192) target = $region56
      $region55: #{tpu_custom_call.1} parent=5 // pred_region
        %s1195 = ssub.s32 %s20, 2
        // Predicated region
        $region57: #{tpu_custom_call.1} parent=55 // pred_check
          %p1196 = pneg %p201
        $region58: #{tpu_custom_call.1} parent=55 // pred_check_branch
          %1198 = sbr.rel (%p1196) target = $region60
        $region59: #{tpu_custom_call.1} parent=55 // pred_region
          %s1199 = sand.u32 %s186, 1
          %s1200 = scalar_lea.sflag [#allocation6], %s1199
          %s1201 = sand.u32 %s186, 1
          %s1202 = smul.addr %s1201, 96
          %s1203 = scalar_lea.vmem [#allocation9], %s1202
          %1204 = dma.done %s1200, 1536
        $region60: #{tpu_custom_call.1} parent=55 // pred_fallthru
          _
      $region56: #{tpu_custom_call.1} parent=5 // pred_fallthru
        _
    $region6: #{tpu_custom_call.1} parent=1 // loop_footer
      %s24 = sadd.s32 1, %s20
    $region7: #{tpu_custom_call.1} parent=1 // loop_footer_branch
      %19 = sbr.rel target = $region3
    $region8: #{tpu_custom_call.1} parent=1 // loop_exit
      _
    %1205 = vsyncpa [#allocation5], 1
    %s1206 = scalar_lea.sflag [#allocation5], 1
    %1207 = vsyncpa %s1206, 1
    %1208 = vsyncpa [#allocation8], 1
    %s1209 = scalar_lea.sflag [#allocation8], 1
    %1210 = vsyncpa %s1209, 1
    %1211 = vsyncpa [#allocation6], 1
    %s1212 = scalar_lea.sflag [#allocation6], 1
    %1213 = vsyncpa %s1212, 1

</llo_original>
